<compile_context>
chip_gen: v7x
topology: tpu7x:2x2x1
jax: 0.10.0
libtpu: 0.0.40
codegen_flags: <defaults>
</compile_context>

<pallas_src>
import numpy as np
import jax
import jax.numpy as jnp
from jax import lax
from jax.experimental import pallas as pl
from jax.experimental.pallas import tpu as pltpu


# ----------------------------------------------------------------------------
# Fused generator kernel:  (C, H*W) slabs, one grid step per image.
# ----------------------------------------------------------------------------

def gen_kernel(x_ref, m_ref,
               g1w1x, g1w1m, g1b1, g1w2, g1b2,
               g2w1x, g2w1m, g2b1, g2w2, g2b2,
               fw1x, fw1m, fb1, fw2, fb2,
               x1_ref, x2_ref, x1i_ref, x2i_ref, flow_ref):
    x = x_ref[...]            # (3, HW)   lane-dense (HW multiple of 128)
    m = m_ref[...]            # (1, HW)
    inv_m = 1.0 - m

    def stage(xin, w1x, w1m, b1, w2, b2, act):
        # pointwise "conv": pre = W1x @ xin + W1m * mask + b1
        pre = (jnp.dot(w1x[...], xin, preferred_element_type=jnp.float32)
               + w1m[...] * m + b1[...])                       # (hidden, HW)
        # ELU
        h = jnp.where(pre > 0, pre, jnp.exp(jnp.minimum(pre, 0.0)) - 1.0)
        y = jnp.dot(w2[...], h, preferred_element_type=jnp.float32) + b2[...]
        if act == "tanh":
            return jnp.tanh(y)
        return 1.0 / (1.0 + jnp.exp(-y))                       # sigmoid

    # coarse stage
    x1 = stage(x, g1w1x, g1w1m, g1b1, g1w2, g1b2, "tanh")
    # paste coarse result into the hole; this is also x1_inpaint
    x1_inp = x1 * m + x * inv_m
    # fine stage + attention-flow head share the same input
    x2 = stage(x1_inp, g2w1x, g2w1m, g2b1, g2w2, g2b2, "tanh")
    flow = stage(x1_inp, fw1x, fw1m, fb1, fw2, fb2, "sigmoid")
    x2_inp = x2 * m + x * inv_m

    x1_ref[...] = x1
    x2_ref[...] = x2
    x1i_ref[...] = x1_inp
    x2i_ref[...] = x2_inp
    flow_ref[...] = flow


def generator_forward(params, x, masks):
    B, C, H, W = x.shape
    HW = H * W
    xs = x.reshape(B, C, HW)                                    # free reshape
    ms = jnp.broadcast_to(masks, (B, 1, H, W)).reshape(B, 1, HW)

    def slab(c):
        return pl.BlockSpec((None, c, HW), lambda b: (b, 0, 0))

    def wspec(shape):
        n = len(shape)
        return pl.BlockSpec(shape, lambda b, _n=n: (0,) * _n)

    g1, g2, gf = params['g1'], params['g2'], params['gflow']
    weight_args = (g1['w1x'], g1['w1m'], g1['b1'], g1['w2'], g1['b2'],
                   g2['w1x'], g2['w1m'], g2['b1'], g2['w2'], g2['b2'],
                   gf['w1x'], gf['w1m'], gf['b1'], gf['w2'], gf['b2'])

    out_shapes = tuple(jax.ShapeDtypeStruct((B, 3, HW), jnp.float32)
                       for _ in range(5))
    outs = pl.pallas_call(
        gen_kernel,
        grid=(B,),
        in_specs=[slab(C), slab(1)] + [wspec(w.shape) for w in weight_args],
        out_specs=tuple(slab(3) for _ in range(5)),
        out_shape=out_shapes,
        compiler_params=pltpu.CompilerParams(
            dimension_semantics=("parallel",)),          # megacore-friendly
    )(xs, ms, *weight_args)

    x1, x2, x1_inp, x2_inp, flow = [o.reshape(B, 3, H, W) for o in outs]
    return x1, x2, x1_inp, x2_inp, flow


# ----------------------------------------------------------------------------
# Fused discriminator kernel: preds for [real; fake], GP on interpolates,
# all three scalar loss contributions in one launch.
# ----------------------------------------------------------------------------

def make_disc_kernel(B):
    def kernel(xf_ref, alpha_ref, w1_ref, w1t_ref, b1_ref, w2c_ref, w2r_ref,
               b2_ref, d_ref, g_ref, gp_ref):
        xf = xf_ref[...]                                   # (2B, Fp)
        w1 = w1_ref[...]
        b1 = b1_ref[...]

        # D([real; fake])
        pre = jnp.dot(xf, w1, preferred_element_type=jnp.float32) + b1
        h = jnp.where(pre > 0, pre, 0.2 * pre)             # LeakyReLU(0.2)
        pred = jnp.dot(h, w2c_ref[...],
                       preferred_element_type=jnp.float32) + b2_ref[...]
        real_p = pred[:B]
        fake_p = pred[B:]
        d_ref[...] = jnp.mean(fake_p - real_p, keepdims=True)   # wgan_d term
        g_ref[...] = jnp.mean(fake_p, keepdims=True)            # wgan_g term

        # gradient penalty on interpolates = alpha*real + (1-alpha)*fake
        alpha = alpha_ref[...]                             # (B, 1)
        interp = alpha * xf[:B] + (1.0 - alpha) * xf[B:]
        pre_i = jnp.dot(interp, w1, preferred_element_type=jnp.float32) + b1
        # analytic dD/dx = (lrelu'(pre_i) * w2^T) @ W1^T  (stays in VMEM)
        dh = jnp.where(pre_i > 0, 1.0, 0.2) * w2r_ref[...]       # (B, Hd)
        grad = jnp.dot(dh, w1t_ref[...],
                       preferred_element_type=jnp.float32)       # (B, Fp)
        norms = jnp.sqrt(jnp.sum(grad * grad, axis=1, keepdims=True))
        gp_ref[...] = jnp.mean((norms - 1.0) ** 2, keepdims=True)
    return kernel


# ----------------------------------------------------------------------------
# Fused loss-reduction kernel (masked L1 + autoencoder terms).
# ----------------------------------------------------------------------------

def make_loss_kernel(coarse_alpha):
    def kernel(lp1_ref, lp2_ref, lpgt_ref, sd_ref,
               x1_ref, x2_ref, gt_ref, im_ref, l1_ref, ae_ref):
        sd = sd_ref[...]
        lpgt = lpgt_ref[...]
        l1c = jnp.mean(jnp.abs((lp1_ref[...] - lpgt) * sd), keepdims=True)
        l1f = jnp.mean(jnp.abs((lp2_ref[...] - lpgt) * sd), keepdims=True)
        l1_ref[...] = coarse_alpha * l1c + l1f

        im = im_ref[...]
        gt = gt_ref[...]
        aec = jnp.mean(jnp.abs((x1_ref[...] - gt) * im), keepdims=True)
        aef = jnp.mean(jnp.abs((x2_ref[...] - gt) * im), keepdims=True)
        ae_ref[...] = coarse_alpha * aec + aef
    return kernel


# ----------------------------------------------------------------------------
# pallas_call glue for the single-block (grid=(1,)) reduction kernels.
# ----------------------------------------------------------------------------

def _full_spec(shape):
    n = len(shape)
    return pl.BlockSpec(shape, lambda i, _n=n: (0,) * _n)


def pallas_apply(kernel, args, out_shapes):
    single = not isinstance(out_shapes, (tuple, list))
    outs = (out_shapes,) if single else tuple(out_shapes)
    out_specs = tuple(_full_spec(s.shape) for s in outs)
    fn = pl.pallas_call(
        kernel,
        grid=(1,),
        in_specs=[_full_spec(a.shape) for a in args],
        out_specs=out_specs[0] if single else out_specs,
        out_shape=out_shapes,
        compiler_params=pltpu.CompilerParams(
            dimension_semantics=("arbitrary",)),
    )
    return fn(*args)


# ----------------------------------------------------------------------------
# Trainer pieces
# ----------------------------------------------------------------------------

def disc_losses(dparams, real, fake, alpha_key):
    """One fused call: (mean(D(fake)-D(real)), mean(D(fake)), gradient penalty)."""
    B = real.shape[0]
    Fp = dparams['w1'].shape[0]

    def flat(t):
        tf = t.reshape(B, -1)
        pad = Fp - tf.shape[1]
        return jnp.pad(tf, ((0, 0), (0, pad))) if pad else tf

    xf = jnp.concatenate([flat(real), flat(lax.stop_gradient(fake))], axis=0)
    alpha = jax.random.uniform(alpha_key, (B, 1), dtype=jnp.float32)

    d_term, g_term, gp = pallas_apply(
        make_disc_kernel(B),
        (xf, alpha, dparams['w1'], dparams['w1_t'], dparams['b1'],
         dparams['w2c'], dparams['w2r'], dparams['b2']),
        (jax.ShapeDtypeStruct((1, 1), jnp.float32),) * 3)
    return d_term[0, 0], g_term[0, 0], gp[0, 0]


def local_patch2(x, bboxes, patch_size):
    """Per-sample crop of (patch_size, patch_size) at (top, left) — static."""
    patches = []
    for i in range(x.shape[0]):
        t, l = int(bboxes[i, 0]), int(bboxes[i, 1])
        patches.append(x[i:i + 1, :, t:t + patch_size, l:l + patch_size])
    return jnp.concatenate(patches, axis=0)


def spatial_discounting_mask(cfg):
    gamma = cfg['spatial_discounting_gamma']
    h, w = cfg['mask_shape']
    vals = np.ones((h, w), np.float32)
    if cfg['discounted_mask']:
        for i in range(h):
            for j in range(w):
                vals[i, j] = max(gamma ** min(i, h - i - 1),
                                 gamma ** min(j, w - j - 1))
    return jnp.asarray(vals)[None, None]      # (1, 1, h, w)


def trainer_forward(params, cfg, x, bboxes, masks, ground_truth, key,
                    compute_loss_g=False):
    losses = {}
    x1, x2, x1_inpaint, x2_inpaint, offset_flow = generator_forward(
        params, x, masks)

    ps = cfg['mask_shape'][0]
    local_patch_gt = local_patch2(ground_truth, bboxes, ps)
    local_patch_x1_inpaint = local_patch2(x1_inpaint, bboxes, ps)
    local_patch_x2_inpaint = local_patch2(x2_inpaint, bboxes, ps)

    k1, k2 = jax.random.split(key)
    ld, lg, lgp = disc_losses(params['localD'], local_patch_gt,
                              local_patch_x2_inpaint, k1)
    gd, gg, ggp = disc_losses(params['globalD'], ground_truth, x2_inpaint, k2)

    a = cfg['global_wgan_loss_alpha']
    losses['wgan_d'] = ld + gd * a
    losses['wgan_gp'] = lgp + ggp

    if compute_loss_g:
        B, C, H, W = x.shape
        sd = spatial_discounting_mask(cfg)                       # (1,1,ps,ps)
        shape_lp = (B * C, ps * ps)
        shape_full = (B * C, H * W)
        sd_b = jnp.broadcast_to(sd, (B, C, ps, ps)).reshape(shape_lp)
        inv_m = jnp.broadcast_to(1.0 - masks, (B, C, H, W)).reshape(shape_full)

        l1, ae = pallas_apply(
            make_loss_kernel(cfg['coarse_l1_alpha']),
            (local_patch_x1_inpaint.reshape(shape_lp),
             local_patch_x2_inpaint.reshape(shape_lp),
             local_patch_gt.reshape(shape_lp), sd_b,
             x1.reshape(shape_full), x2.reshape(shape_full),
             ground_truth.reshape(shape_full), inv_m),
            (jax.ShapeDtypeStruct((1, 1), jnp.float32),) * 2)
        losses['l1'] = l1[0, 0]
        losses['ae'] = ae[0, 0]
        # forward values of the non-detached second dis_forward are identical
        # to the fused pass above, so reuse its mean(D(fake)) terms.
        losses['wgan_g'] = -lg - gg * a

    return losses, x2_inpaint, offset_flow


# ----------------------------------------------------------------------------
# Deterministic parameter init
# ----------------------------------------------------------------------------

def _pad_to_128(n):
    return ((n + 127) // 128) * 128


def init_params(key, hidden=32, dis_hidden=64, local_feat=3 * 8 * 8,
                global_feat=3 * 16 * 16):
    ks = jax.random.split(key, 5)

    def gen_stage(k):
        k1, k2, k3 = jax.random.split(k, 3)
        s1 = 1.0 / np.sqrt(4.0)
        return {
            'w1x': (s1 * jax.random.normal(k1, (hidden, 3))).astype(jnp.float32),
            'w1m': (s1 * jax.random.normal(k2, (hidden, 1))).astype(jnp.float32),
            'b1': jnp.zeros((hidden, 1), jnp.float32),
            'w2': ((1.0 / np.sqrt(hidden))
                   * jax.random.normal(k3, (3, hidden))).astype(jnp.float32),
            'b2': jnp.zeros((3, 1), jnp.float32),
        }

    def disc(k, feat):
        k1, k2 = jax.random.split(k)
        feat_pad = _pad_to_128(feat)
        w1 = ((1.0 / np.sqrt(feat))
              * jax.random.normal(k1, (feat, dis_hidden))).astype(jnp.float32)
        if feat_pad > feat:
            # zero-padded rows: padded input columns contribute nothing to
            # prediction or input gradient -> exact w.r.t. unpadded D.
            w1 = jnp.pad(w1, ((0, feat_pad - feat), (0, 0)))
        w2c = ((1.0 / np.sqrt(dis_hidden))
               * jax.random.normal(k2, (dis_hidden, 1))).astype(jnp.float32)
        return {
            'w1': w1,                     # (Fp, Hd)  forward
            'w1_t': w1.T,                 # (Hd, Fp)  pre-transposed for dD/dx
            'b1': jnp.zeros((1, dis_hidden), jnp.float32),
            'w2c': w2c,                   # (Hd, 1)
            'w2r': w2c.T,                 # (1, Hd)
            'b2': jnp.zeros((1, 1), jnp.float32),
        }

    return {
        'g1': gen_stage(ks[0]),
        'g2': gen_stage(ks[1]),
        'gflow': gen_stage(ks[2]),
        'localD': disc(ks[3], local_feat),
        'globalD': disc(ks[4], global_feat),
    }


# ----------------------------------------------------------------------------
# Main
# ----------------------------------------------------------------------------

if __name__ == "__main__":
    key = jax.random.PRNGKey(0)
    kp, kx, kgt, kgp = jax.random.split(key, 4)

    B, C, H, W = 2, 3, 16, 16
    patch = 8
    cfg = {
        'image_size': (H, W),
        'mask_shape': (patch, patch),
        'spatial_discounting_gamma': 0.9,
        'discounted_mask': True,
        'global_wgan_loss_alpha': 1.0,
        'coarse_l1_alpha': 1.2,
    }

    params = init_params(kp, local_feat=3 * patch * patch,
                         global_feat=3 * H * W)

    x = jax.random.uniform(kx, (B, C, H, W), jnp.float32, -1.0, 1.0)
    ground_truth = jax.random.uniform(kgt, (B, C, H, W), jnp.float32, -1.0, 1.0)

    bboxes = np.array([[4, 4, patch, patch],
                       [2, 6, patch, patch]], dtype=np.int32)
    masks_np = np.zeros((B, 1, H, W), np.float32)
    for i in range(B):
        t, l, h, w = bboxes[i]
        masks_np[i, 0, t:t + h, l:l + w] = 1.0
    masks = jnp.asarray(masks_np)

    losses, x2_inpaint, offset_flow = trainer_forward(
        params, cfg, x, bboxes, masks, ground_truth, kgp, compute_loss_g=True)

    jax.block_until_ready((losses, x2_inpaint, offset_flow))
    assert x2_inpaint.shape == (B, C, H, W)
    assert offset_flow.shape == (B, 3, H, W)
    assert set(losses) == {'wgan_d', 'wgan_gp', 'l1', 'ae', 'wgan_g'}
    for k, v in losses.items():
        assert np.isfinite(float(v)), k
    print("KERNEL_OK")
</pallas_src>

<mosaic_0001>
module attributes {stable_mosaic.version = 11 : i64} {
  func.func @gen_kernel(%arg0: i32, %arg1: memref<1x3x256xf32, #tpu.memory_space<vmem>>, %arg2: memref<1x1x256xf32, #tpu.memory_space<vmem>>, %arg3: memref<32x3xf32, #tpu.memory_space<vmem>>, %arg4: memref<32x1xf32, #tpu.memory_space<vmem>>, %arg5: memref<32x1xf32, #tpu.memory_space<vmem>>, %arg6: memref<3x32xf32, #tpu.memory_space<vmem>>, %arg7: memref<3x1xf32, #tpu.memory_space<vmem>>, %arg8: memref<32x3xf32, #tpu.memory_space<vmem>>, %arg9: memref<32x1xf32, #tpu.memory_space<vmem>>, %arg10: memref<32x1xf32, #tpu.memory_space<vmem>>, %arg11: memref<3x32xf32, #tpu.memory_space<vmem>>, %arg12: memref<3x1xf32, #tpu.memory_space<vmem>>, %arg13: memref<32x3xf32, #tpu.memory_space<vmem>>, %arg14: memref<32x1xf32, #tpu.memory_space<vmem>>, %arg15: memref<32x1xf32, #tpu.memory_space<vmem>>, %arg16: memref<3x32xf32, #tpu.memory_space<vmem>>, %arg17: memref<3x1xf32, #tpu.memory_space<vmem>>, %arg18: memref<1x3x256xf32, #tpu.memory_space<vmem>>, %arg19: memref<1x3x256xf32, #tpu.memory_space<vmem>>, %arg20: memref<1x3x256xf32, #tpu.memory_space<vmem>>, %arg21: memref<1x3x256xf32, #tpu.memory_space<vmem>>, %arg22: memref<1x3x256xf32, #tpu.memory_space<vmem>>) attributes {dimension_semantics = [#tpu.dimension_semantics<parallel>], iteration_bounds = array<i64: 2>, scalar_prefetch = 0 : i64, scratch_operands = 0 : i64, tpu.core_type = #tpu.core_type<tc>, window_params = [{transform_indices = @transform_0, window_bounds = array<i64: 1, 3, 256>}, {transform_indices = @transform_1, window_bounds = array<i64: 1, 1, 256>}, {pipeline_mode = #tpu.pipeline_mode<synchronous>, transform_indices = @transform_2, window_bounds = array<i64: 32, 3>}, {pipeline_mode = #tpu.pipeline_mode<synchronous>, transform_indices = @transform_3, window_bounds = array<i64: 32, 1>}, {pipeline_mode = #tpu.pipeline_mode<synchronous>, transform_indices = @transform_4, window_bounds = array<i64: 32, 1>}, {pipeline_mode = #tpu.pipeline_mode<synchronous>, transform_indices = @transform_5, window_bounds = array<i64: 3, 32>}, {pipeline_mode = #tpu.pipeline_mode<synchronous>, transform_indices = @transform_6, window_bounds = array<i64: 3, 1>}, {pipeline_mode = #tpu.pipeline_mode<synchronous>, transform_indices = @transform_7, window_bounds = array<i64: 32, 3>}, {pipeline_mode = #tpu.pipeline_mode<synchronous>, transform_indices = @transform_8, window_bounds = array<i64: 32, 1>}, {pipeline_mode = #tpu.pipeline_mode<synchronous>, transform_indices = @transform_9, window_bounds = array<i64: 32, 1>}, {pipeline_mode = #tpu.pipeline_mode<synchronous>, transform_indices = @transform_10, window_bounds = array<i64: 3, 32>}, {pipeline_mode = #tpu.pipeline_mode<synchronous>, transform_indices = @transform_11, window_bounds = array<i64: 3, 1>}, {pipeline_mode = #tpu.pipeline_mode<synchronous>, transform_indices = @transform_12, window_bounds = array<i64: 32, 3>}, {pipeline_mode = #tpu.pipeline_mode<synchronous>, transform_indices = @transform_13, window_bounds = array<i64: 32, 1>}, {pipeline_mode = #tpu.pipeline_mode<synchronous>, transform_indices = @transform_14, window_bounds = array<i64: 32, 1>}, {pipeline_mode = #tpu.pipeline_mode<synchronous>, transform_indices = @transform_15, window_bounds = array<i64: 3, 32>}, {pipeline_mode = #tpu.pipeline_mode<synchronous>, transform_indices = @transform_16, window_bounds = array<i64: 3, 1>}, {transform_indices = @transform_17, window_bounds = array<i64: 1, 3, 256>}, {transform_indices = @transform_18, window_bounds = array<i64: 1, 3, 256>}, {transform_indices = @transform_19, window_bounds = array<i64: 1, 3, 256>}, {transform_indices = @transform_20, window_bounds = array<i64: 1, 3, 256>}, {transform_indices = @transform_21, window_bounds = array<i64: 1, 3, 256>}]} {
    %c0 = arith.constant 0 : index
    %c0_0 = arith.constant 0 : index
    %c0_1 = arith.constant 0 : index
    %0 = vector.load %arg1[%c0, %c0_0, %c0_1] : memref<1x3x256xf32, #tpu.memory_space<vmem>>, vector<1x3x256xf32>
    %1 = vector.shape_cast %0 : vector<1x3x256xf32> to vector<3x256xf32>
    %c0_2 = arith.constant 0 : index
    %c0_3 = arith.constant 0 : index
    %c0_4 = arith.constant 0 : index
    %2 = vector.load %arg2[%c0_2, %c0_3, %c0_4] : memref<1x1x256xf32, #tpu.memory_space<vmem>>, vector<1x1x256xf32>
    %3 = vector.shape_cast %2 : vector<1x1x256xf32> to vector<1x256xf32>
    %cst = arith.constant 1.000000e+00 : f32
    %4 = vector.broadcast %cst : f32 to vector<1x256xf32>
    %5 = arith.subf %4, %3 : vector<1x256xf32>
    %c0_5 = arith.constant 0 : index
    %c0_6 = arith.constant 0 : index
    %6 = vector.load %arg3[%c0_5, %c0_6] : memref<32x3xf32, #tpu.memory_space<vmem>>, vector<32x3xf32>
    %cst_7 = arith.constant dense<0.000000e+00> : vector<32x256xf32>
    %7 = tpu.matmul %6, %1, %cst_7 {dimension_numbers = #tpu.dot_dimension_numbers<[1], [0], [0], [1], [0, 0, 1, 1], [], []>} : vector<32x3xf32>, vector<3x256xf32>, vector<32x256xf32> -> vector<32x256xf32>
    %c0_8 = arith.constant 0 : index
    %c0_9 = arith.constant 0 : index
    %8 = vector.load %arg4[%c0_8, %c0_9] : memref<32x1xf32, #tpu.memory_space<vmem>>, vector<32x1xf32>
    %9 = vector.broadcast %8 : vector<32x1xf32> to vector<32x256xf32>
    %10 = vector.broadcast %3 : vector<1x256xf32> to vector<32x256xf32>
    %11 = arith.mulf %9, %10 : vector<32x256xf32>
    %12 = arith.addf %7, %11 : vector<32x256xf32>
    %c0_10 = arith.constant 0 : index
    %c0_11 = arith.constant 0 : index
    %13 = vector.load %arg5[%c0_10, %c0_11] : memref<32x1xf32, #tpu.memory_space<vmem>>, vector<32x1xf32>
    %14 = vector.broadcast %13 : vector<32x1xf32> to vector<32x256xf32>
    %15 = arith.addf %12, %14 : vector<32x256xf32>
    %cst_12 = arith.constant 0.000000e+00 : f32
    %16 = vector.broadcast %cst_12 : f32 to vector<32x256xf32>
    %17 = arith.cmpf ogt, %15, %16 : vector<32x256xf32>
    %cst_13 = arith.constant 0.000000e+00 : f32
    %18 = vector.broadcast %cst_13 : f32 to vector<32x256xf32>
    %19 = arith.minimumf %15, %18 : vector<32x256xf32>
    %20 = math.exp %19 : vector<32x256xf32>
    %cst_14 = arith.constant 1.000000e+00 : f32
    %21 = vector.broadcast %cst_14 : f32 to vector<32x256xf32>
    %22 = arith.subf %20, %21 : vector<32x256xf32>
    %23 = arith.select %17, %15, %22 : vector<32x256xi1>, vector<32x256xf32>
    %c0_15 = arith.constant 0 : index
    %c0_16 = arith.constant 0 : index
    %24 = vector.load %arg6[%c0_15, %c0_16] : memref<3x32xf32, #tpu.memory_space<vmem>>, vector<3x32xf32>
    %cst_17 = arith.constant dense<0.000000e+00> : vector<3x256xf32>
    %25 = tpu.matmul %24, %23, %cst_17 {dimension_numbers = #tpu.dot_dimension_numbers<[1], [0], [0], [1], [0, 0, 1, 1], [], []>} : vector<3x32xf32>, vector<32x256xf32>, vector<3x256xf32> -> vector<3x256xf32>
    %c0_18 = arith.constant 0 : index
    %c0_19 = arith.constant 0 : index
    %26 = vector.load %arg7[%c0_18, %c0_19] : memref<3x1xf32, #tpu.memory_space<vmem>>, vector<3x1xf32>
    %27 = vector.broadcast %26 : vector<3x1xf32> to vector<3x256xf32>
    %28 = arith.addf %25, %27 : vector<3x256xf32>
    %29 = math.tanh %28 : vector<3x256xf32>
    %30 = vector.broadcast %3 : vector<1x256xf32> to vector<3x256xf32>
    %31 = arith.mulf %29, %30 : vector<3x256xf32>
    %32 = vector.broadcast %5 : vector<1x256xf32> to vector<3x256xf32>
    %33 = arith.mulf %1, %32 : vector<3x256xf32>
    %34 = arith.addf %31, %33 : vector<3x256xf32>
    %c0_20 = arith.constant 0 : index
    %c0_21 = arith.constant 0 : index
    %35 = vector.load %arg8[%c0_20, %c0_21] : memref<32x3xf32, #tpu.memory_space<vmem>>, vector<32x3xf32>
    %cst_22 = arith.constant dense<0.000000e+00> : vector<32x256xf32>
    %36 = tpu.matmul %35, %34, %cst_22 {dimension_numbers = #tpu.dot_dimension_numbers<[1], [0], [0], [1], [0, 0, 1, 1], [], []>} : vector<32x3xf32>, vector<3x256xf32>, vector<32x256xf32> -> vector<32x256xf32>
    %c0_23 = arith.constant 0 : index
    %c0_24 = arith.constant 0 : index
    %37 = vector.load %arg9[%c0_23, %c0_24] : memref<32x1xf32, #tpu.memory_space<vmem>>, vector<32x1xf32>
    %38 = vector.broadcast %37 : vector<32x1xf32> to vector<32x256xf32>
    %39 = vector.broadcast %3 : vector<1x256xf32> to vector<32x256xf32>
    %40 = arith.mulf %38, %39 : vector<32x256xf32>
    %41 = arith.addf %36, %40 : vector<32x256xf32>
    %c0_25 = arith.constant 0 : index
    %c0_26 = arith.constant 0 : index
    %42 = vector.load %arg10[%c0_25, %c0_26] : memref<32x1xf32, #tpu.memory_space<vmem>>, vector<32x1xf32>
    %43 = vector.broadcast %42 : vector<32x1xf32> to vector<32x256xf32>
    %44 = arith.addf %41, %43 : vector<32x256xf32>
    %cst_27 = arith.constant 0.000000e+00 : f32
    %45 = vector.broadcast %cst_27 : f32 to vector<32x256xf32>
    %46 = arith.cmpf ogt, %44, %45 : vector<32x256xf32>
    %cst_28 = arith.constant 0.000000e+00 : f32
    %47 = vector.broadcast %cst_28 : f32 to vector<32x256xf32>
    %48 = arith.minimumf %44, %47 : vector<32x256xf32>
    %49 = math.exp %48 : vector<32x256xf32>
    %cst_29 = arith.constant 1.000000e+00 : f32
    %50 = vector.broadcast %cst_29 : f32 to vector<32x256xf32>
    %51 = arith.subf %49, %50 : vector<32x256xf32>
    %52 = arith.select %46, %44, %51 : vector<32x256xi1>, vector<32x256xf32>
    %c0_30 = arith.constant 0 : index
    %c0_31 = arith.constant 0 : index
    %53 = vector.load %arg11[%c0_30, %c0_31] : memref<3x32xf32, #tpu.memory_space<vmem>>, vector<3x32xf32>
    %cst_32 = arith.constant dense<0.000000e+00> : vector<3x256xf32>
    %54 = tpu.matmul %53, %52, %cst_32 {dimension_numbers = #tpu.dot_dimension_numbers<[1], [0], [0], [1], [0, 0, 1, 1], [], []>} : vector<3x32xf32>, vector<32x256xf32>, vector<3x256xf32> -> vector<3x256xf32>
    %c0_33 = arith.constant 0 : index
    %c0_34 = arith.constant 0 : index
    %55 = vector.load %arg12[%c0_33, %c0_34] : memref<3x1xf32, #tpu.memory_space<vmem>>, vector<3x1xf32>
    %56 = vector.broadcast %55 : vector<3x1xf32> to vector<3x256xf32>
    %57 = arith.addf %54, %56 : vector<3x256xf32>
    %58 = math.tanh %57 : vector<3x256xf32>
    %c0_35 = arith.constant 0 : index
    %c0_36 = arith.constant 0 : index
    %59 = vector.load %arg13[%c0_35, %c0_36] : memref<32x3xf32, #tpu.memory_space<vmem>>, vector<32x3xf32>
    %cst_37 = arith.constant dense<0.000000e+00> : vector<32x256xf32>
    %60 = tpu.matmul %59, %34, %cst_37 {dimension_numbers = #tpu.dot_dimension_numbers<[1], [0], [0], [1], [0, 0, 1, 1], [], []>} : vector<32x3xf32>, vector<3x256xf32>, vector<32x256xf32> -> vector<32x256xf32>
    %c0_38 = arith.constant 0 : index
    %c0_39 = arith.constant 0 : index
    %61 = vector.load %arg14[%c0_38, %c0_39] : memref<32x1xf32, #tpu.memory_space<vmem>>, vector<32x1xf32>
    %62 = vector.broadcast %61 : vector<32x1xf32> to vector<32x256xf32>
    %63 = vector.broadcast %3 : vector<1x256xf32> to vector<32x256xf32>
    %64 = arith.mulf %62, %63 : vector<32x256xf32>
    %65 = arith.addf %60, %64 : vector<32x256xf32>
    %c0_40 = arith.constant 0 : index
    %c0_41 = arith.constant 0 : index
    %66 = vector.load %arg15[%c0_40, %c0_41] : memref<32x1xf32, #tpu.memory_space<vmem>>, vector<32x1xf32>
    %67 = vector.broadcast %66 : vector<32x1xf32> to vector<32x256xf32>
    %68 = arith.addf %65, %67 : vector<32x256xf32>
    %cst_42 = arith.constant 0.000000e+00 : f32
    %69 = vector.broadcast %cst_42 : f32 to vector<32x256xf32>
    %70 = arith.cmpf ogt, %68, %69 : vector<32x256xf32>
    %cst_43 = arith.constant 0.000000e+00 : f32
    %71 = vector.broadcast %cst_43 : f32 to vector<32x256xf32>
    %72 = arith.minimumf %68, %71 : vector<32x256xf32>
    %73 = math.exp %72 : vector<32x256xf32>
    %cst_44 = arith.constant 1.000000e+00 : f32
    %74 = vector.broadcast %cst_44 : f32 to vector<32x256xf32>
    %75 = arith.subf %73, %74 : vector<32x256xf32>
    %76 = arith.select %70, %68, %75 : vector<32x256xi1>, vector<32x256xf32>
    %c0_45 = arith.constant 0 : index
    %c0_46 = arith.constant 0 : index
    %77 = vector.load %arg16[%c0_45, %c0_46] : memref<3x32xf32, #tpu.memory_space<vmem>>, vector<3x32xf32>
    %cst_47 = arith.constant dense<0.000000e+00> : vector<3x256xf32>
    %78 = tpu.matmul %77, %76, %cst_47 {dimension_numbers = #tpu.dot_dimension_numbers<[1], [0], [0], [1], [0, 0, 1, 1], [], []>} : vector<3x32xf32>, vector<32x256xf32>, vector<3x256xf32> -> vector<3x256xf32>
    %c0_48 = arith.constant 0 : index
    %c0_49 = arith.constant 0 : index
    %79 = vector.load %arg17[%c0_48, %c0_49] : memref<3x1xf32, #tpu.memory_space<vmem>>, vector<3x1xf32>
    %80 = vector.broadcast %79 : vector<3x1xf32> to vector<3x256xf32>
    %81 = arith.addf %78, %80 : vector<3x256xf32>
    %cst_50 = arith.constant 0.000000e+00 : f32
    %82 = vector.broadcast %cst_50 : f32 to vector<3x256xf32>
    %83 = arith.subf %82, %81 : vector<3x256xf32>
    %84 = math.exp %83 : vector<3x256xf32>
    %cst_51 = arith.constant 1.000000e+00 : f32
    %85 = vector.broadcast %cst_51 : f32 to vector<3x256xf32>
    %86 = arith.addf %85, %84 : vector<3x256xf32>
    %cst_52 = arith.constant 1.000000e+00 : f32
    %87 = vector.broadcast %cst_52 : f32 to vector<3x256xf32>
    %88 = arith.divf %87, %86 : vector<3x256xf32>
    %89 = vector.broadcast %3 : vector<1x256xf32> to vector<3x256xf32>
    %90 = arith.mulf %58, %89 : vector<3x256xf32>
    %91 = vector.broadcast %5 : vector<1x256xf32> to vector<3x256xf32>
    %92 = arith.mulf %1, %91 : vector<3x256xf32>
    %93 = arith.addf %90, %92 : vector<3x256xf32>
    %c0_53 = arith.constant 0 : index
    %c0_54 = arith.constant 0 : index
    %c0_55 = arith.constant 0 : index
    %94 = vector.load %arg18[%c0_53, %c0_54, %c0_55] : memref<1x3x256xf32, #tpu.memory_space<vmem>>, vector<1x3x256xf32>
    %95 = vector.shape_cast %94 : vector<1x3x256xf32> to vector<3x256xf32>
    %96 = vector.shape_cast %29 : vector<3x256xf32> to vector<1x3x256xf32>
    tpu.vector_store %arg18[%c0_53, %c0_54, %c0_55], %96 {strides = array<i32>} : memref<1x3x256xf32, #tpu.memory_space<vmem>>, vector<1x3x256xf32>,
    %c0_56 = arith.constant 0 : index
    %c0_57 = arith.constant 0 : index
    %c0_58 = arith.constant 0 : index
    %97 = vector.load %arg19[%c0_56, %c0_57, %c0_58] : memref<1x3x256xf32, #tpu.memory_space<vmem>>, vector<1x3x256xf32>
    %98 = vector.shape_cast %97 : vector<1x3x256xf32> to vector<3x256xf32>
    %99 = vector.shape_cast %58 : vector<3x256xf32> to vector<1x3x256xf32>
    tpu.vector_store %arg19[%c0_56, %c0_57, %c0_58], %99 {strides = array<i32>} : memref<1x3x256xf32, #tpu.memory_space<vmem>>, vector<1x3x256xf32>,
    %c0_59 = arith.constant 0 : index
    %c0_60 = arith.constant 0 : index
    %c0_61 = arith.constant 0 : index
    %100 = vector.load %arg20[%c0_59, %c0_60, %c0_61] : memref<1x3x256xf32, #tpu.memory_space<vmem>>, vector<1x3x256xf32>
    %101 = vector.shape_cast %100 : vector<1x3x256xf32> to vector<3x256xf32>
    %102 = vector.shape_cast %34 : vector<3x256xf32> to vector<1x3x256xf32>
    tpu.vector_store %arg20[%c0_59, %c0_60, %c0_61], %102 {strides = array<i32>} : memref<1x3x256xf32, #tpu.memory_space<vmem>>, vector<1x3x256xf32>,
    %c0_62 = arith.constant 0 : index
    %c0_63 = arith.constant 0 : index
    %c0_64 = arith.constant 0 : index
    %103 = vector.load %arg21[%c0_62, %c0_63, %c0_64] : memref<1x3x256xf32, #tpu.memory_space<vmem>>, vector<1x3x256xf32>
    %104 = vector.shape_cast %103 : vector<1x3x256xf32> to vector<3x256xf32>
    %105 = vector.shape_cast %93 : vector<3x256xf32> to vector<1x3x256xf32>
    tpu.vector_store %arg21[%c0_62, %c0_63, %c0_64], %105 {strides = array<i32>} : memref<1x3x256xf32, #tpu.memory_space<vmem>>, vector<1x3x256xf32>,
    %c0_65 = arith.constant 0 : index
    %c0_66 = arith.constant 0 : index
    %c0_67 = arith.constant 0 : index
    %106 = vector.load %arg22[%c0_65, %c0_66, %c0_67] : memref<1x3x256xf32, #tpu.memory_space<vmem>>, vector<1x3x256xf32>
    %107 = vector.shape_cast %106 : vector<1x3x256xf32> to vector<3x256xf32>
    %108 = vector.shape_cast %88 : vector<3x256xf32> to vector<1x3x256xf32>
    tpu.vector_store %arg22[%c0_65, %c0_66, %c0_67], %108 {strides = array<i32>} : memref<1x3x256xf32, #tpu.memory_space<vmem>>, vector<1x3x256xf32>,
    return
  }
  func.func @transform_0(%arg0: i32) -> (i32, i32, i32) {
    %c0_i32 = arith.constant 0 : i32
    %c0_i32_0 = arith.constant 0 : i32
    %c0_i32_1 = arith.constant 0 : i32
    return %arg0, %c0_i32, %c0_i32_0 : i32, i32, i32
  }
  func.func @transform_1(%arg0: i32) -> (i32, i32, i32) {
    %c0_i32 = arith.constant 0 : i32
    %c0_i32_0 = arith.constant 0 : i32
    %c0_i32_1 = arith.constant 0 : i32
    return %arg0, %c0_i32, %c0_i32_0 : i32, i32, i32
  }
  func.func @transform_2(%arg0: i32) -> (i32, i32) {
    %c0_i32 = arith.constant 0 : i32
    %c0_i32_0 = arith.constant 0 : i32
    %c0_i32_1 = arith.constant 0 : i32
    return %c0_i32, %c0_i32_0 : i32, i32
  }
  func.func @transform_3(%arg0: i32) -> (i32, i32) {
    %c0_i32 = arith.constant 0 : i32
    %c0_i32_0 = arith.constant 0 : i32
    %c0_i32_1 = arith.constant 0 : i32
    return %c0_i32, %c0_i32_0 : i32, i32
  }
  func.func @transform_4(%arg0: i32) -> (i32, i32) {
    %c0_i32 = arith.constant 0 : i32
    %c0_i32_0 = arith.constant 0 : i32
    %c0_i32_1 = arith.constant 0 : i32
    return %c0_i32, %c0_i32_0 : i32, i32
  }
  func.func @transform_5(%arg0: i32) -> (i32, i32) {
    %c0_i32 = arith.constant 0 : i32
    %c0_i32_0 = arith.constant 0 : i32
    %c0_i32_1 = arith.constant 0 : i32
    return %c0_i32, %c0_i32_0 : i32, i32
  }
  func.func @transform_6(%arg0: i32) -> (i32, i32) {
    %c0_i32 = arith.constant 0 : i32
    %c0_i32_0 = arith.constant 0 : i32
    %c0_i32_1 = arith.constant 0 : i32
    return %c0_i32, %c0_i32_0 : i32, i32
  }
  func.func @transform_7(%arg0: i32) -> (i32, i32) {
    %c0_i32 = arith.constant 0 : i32
    %c0_i32_0 = arith.constant 0 : i32
    %c0_i32_1 = arith.constant 0 : i32
    return %c0_i32, %c0_i32_0 : i32, i32
  }
  func.func @transform_8(%arg0: i32) -> (i32, i32) {
    %c0_i32 = arith.constant 0 : i32
    %c0_i32_0 = arith.constant 0 : i32
    %c0_i32_1 = arith.constant 0 : i32
    return %c0_i32, %c0_i32_0 : i32, i32
  }
  func.func @transform_9(%arg0: i32) -> (i32, i32) {
    %c0_i32 = arith.constant 0 : i32
    %c0_i32_0 = arith.constant 0 : i32
    %c0_i32_1 = arith.constant 0 : i32
    return %c0_i32, %c0_i32_0 : i32, i32
  }
  func.func @transform_10(%arg0: i32) -> (i32, i32) {
    %c0_i32 = arith.constant 0 : i32
    %c0_i32_0 = arith.constant 0 : i32
    %c0_i32_1 = arith.constant 0 : i32
    return %c0_i32, %c0_i32_0 : i32, i32
  }
  func.func @transform_11(%arg0: i32) -> (i32, i32) {
    %c0_i32 = arith.constant 0 : i32
    %c0_i32_0 = arith.constant 0 : i32
    %c0_i32_1 = arith.constant 0 : i32
    return %c0_i32, %c0_i32_0 : i32, i32
  }
  func.func @transform_12(%arg0: i32) -> (i32, i32) {
    %c0_i32 = arith.constant 0 : i32
    %c0_i32_0 = arith.constant 0 : i32
    %c0_i32_1 = arith.constant 0 : i32
    return %c0_i32, %c0_i32_0 : i32, i32
  }
  func.func @transform_13(%arg0: i32) -> (i32, i32) {
    %c0_i32 = arith.constant 0 : i32
    %c0_i32_0 = arith.constant 0 : i32
    %c0_i32_1 = arith.constant 0 : i32
    return %c0_i32, %c0_i32_0 : i32, i32
  }
  func.func @transform_14(%arg0: i32) -> (i32, i32) {
    %c0_i32 = arith.constant 0 : i32
    %c0_i32_0 = arith.constant 0 : i32
    %c0_i32_1 = arith.constant 0 : i32
    return %c0_i32, %c0_i32_0 : i32, i32
  }
  func.func @transform_15(%arg0: i32) -> (i32, i32) {
    %c0_i32 = arith.constant 0 : i32
    %c0_i32_0 = arith.constant 0 : i32
    %c0_i32_1 = arith.constant 0 : i32
    return %c0_i32, %c0_i32_0 : i32, i32
  }
  func.func @transform_16(%arg0: i32) -> (i32, i32) {
    %c0_i32 = arith.constant 0 : i32
    %c0_i32_0 = arith.constant 0 : i32
    %c0_i32_1 = arith.constant 0 : i32
    return %c0_i32, %c0_i32_0 : i32, i32
  }
  func.func @transform_17(%arg0: i32) -> (i32, i32, i32) {
    %c0_i32 = arith.constant 0 : i32
    %c0_i32_0 = arith.constant 0 : i32
    %c0_i32_1 = arith.constant 0 : i32
    return %arg0, %c0_i32, %c0_i32_0 : i32, i32, i32
  }
  func.func @transform_18(%arg0: i32) -> (i32, i32, i32) {
    %c0_i32 = arith.constant 0 : i32
    %c0_i32_0 = arith.constant 0 : i32
    %c0_i32_1 = arith.constant 0 : i32
    return %arg0, %c0_i32, %c0_i32_0 : i32, i32, i32
  }
  func.func @transform_19(%arg0: i32) -> (i32, i32, i32) {
    %c0_i32 = arith.constant 0 : i32
    %c0_i32_0 = arith.constant 0 : i32
    %c0_i32_1 = arith.constant 0 : i32
    return %arg0, %c0_i32, %c0_i32_0 : i32, i32, i32
  }
  func.func @transform_20(%arg0: i32) -> (i32, i32, i32) {
    %c0_i32 = arith.constant 0 : i32
    %c0_i32_0 = arith.constant 0 : i32
    %c0_i32_1 = arith.constant 0 : i32
    return %arg0, %c0_i32, %c0_i32_0 : i32, i32, i32
  }
  func.func @transform_21(%arg0: i32) -> (i32, i32, i32) {
    %c0_i32 = arith.constant 0 : i32
    %c0_i32_0 = arith.constant 0 : i32
    %c0_i32_1 = arith.constant 0 : i32
    return %arg0, %c0_i32, %c0_i32_0 : i32, i32, i32
  }
}

</mosaic_0001>

<llo_original>
// kernel: tpu_custom_call.1
$region0: #{tpu_custom_call.1}
  #allocation0 [shape = 'u32[]', space=smem, size = 0x4, offset = 0x4, fixed_abs, tag = 'smem constant byte address 0x4 - core index']
  #allocation1 [shape = 'u32[144,128]{1,0:T(1,128)}', space=vmem, size = 0x12000, scoped, tag = 'internal scratch']
  %s0 = inlined_call_operand.vmem [shape: f32[2,3,256], index: 0, kind: input, shape index: {}]
  %s1 = inlined_call_operand.vmem [shape: f32[2,1,256], index: 1, kind: input, shape index: {}]
  %s2 = inlined_call_operand.vmem [shape: f32[32,3], index: 2, kind: input, shape index: {}]
  %s3 = inlined_call_operand.vmem [shape: f32[32,1], index: 3, kind: input, shape index: {}]
  %s4 = inlined_call_operand.vmem [shape: f32[32,1], index: 4, kind: input, shape index: {}]
  %s5 = inlined_call_operand.vmem [shape: f32[3,32], index: 5, kind: input, shape index: {}]
  %s6 = inlined_call_operand.vmem [shape: f32[3,1], index: 6, kind: input, shape index: {}]
  %s7 = inlined_call_operand.vmem [shape: f32[32,3], index: 7, kind: input, shape index: {}]
  %s8 = inlined_call_operand.vmem [shape: f32[32,1], index: 8, kind: input, shape index: {}]
  %s9 = inlined_call_operand.vmem [shape: f32[32,1], index: 9, kind: input, shape index: {}]
  %s10 = inlined_call_operand.vmem [shape: f32[3,32], index: 10, kind: input, shape index: {}]
  %s11 = inlined_call_operand.vmem [shape: f32[3,1], index: 11, kind: input, shape index: {}]
  %s12 = inlined_call_operand.vmem [shape: f32[32,3], index: 12, kind: input, shape index: {}]
  %s13 = inlined_call_operand.vmem [shape: f32[32,1], index: 13, kind: input, shape index: {}]
  %s14 = inlined_call_operand.vmem [shape: f32[32,1], index: 14, kind: input, shape index: {}]
  %s15 = inlined_call_operand.vmem [shape: f32[3,32], index: 15, kind: input, shape index: {}]
  %s16 = inlined_call_operand.vmem [shape: f32[3,1], index: 16, kind: input, shape index: {}]
  %s17 = inlined_call_operand.vmem [shape: f32[2,3,256], index: 17, kind: output, shape index: {0}]
  %s18 = inlined_call_operand.vmem [shape: f32[2,3,256], index: 18, kind: output, shape index: {1}]
  %s19 = inlined_call_operand.vmem [shape: f32[2,3,256], index: 19, kind: output, shape index: {2}]
  %s20 = inlined_call_operand.vmem [shape: f32[2,3,256], index: 20, kind: output, shape index: {3}]
  %s21 = inlined_call_operand.vmem [shape: f32[2,3,256], index: 21, kind: output, shape index: {4}]
  %22 = xla_tuple %s17, %s18, %s19, %s20, %s21
  %s23 = sld [smem:[#allocation0]]
  $region133: #{tpu_custom_call.1} parent=0
    _
  %s25 = ssub.s32 1, %s23
  %s26 = scalar_select 0, %s25, %s23
  loop: start=0, step=1, limit=4
  $region2: #{tpu_custom_call.1} parent=0 // loop_pre_header
    _
  $region3: #{tpu_custom_call.1} parent=0 // loop_header
    %s28 = sphi 0, %s32
    %p29 = scmp.ge.s32.totalorder %s28, 4
    %s38 = sphi 0, %s40
    %s41 = sphi 0, %s38
    %s42 = sphi 0, %s41
    %s58 = sphi 0, %s42
    %s64 = sphi 0, %s66
    %s67 = sphi 0, %s64
    %s68 = sphi 0, %s67
    %s84 = sphi 0, %s68
    %s88 = sphi 0, %s88
    %s90 = sphi 0, %s88
    %s91 = sphi 0, %s90
    %s105 = sphi 0, %s91
    %s109 = sphi 0, %s109
    %s111 = sphi 0, %s109
    %s112 = sphi 0, %s111
    %s126 = sphi 0, %s112
    %s130 = sphi 0, %s130
    %s132 = sphi 0, %s130
    %s133 = sphi 0, %s132
    %s147 = sphi 0, %s133
    %s151 = sphi 0, %s151
    %s153 = sphi 0, %s151
    %s154 = sphi 0, %s153
    %s168 = sphi 0, %s154
    %s172 = sphi 0, %s172
    %s174 = sphi 0, %s172
    %s175 = sphi 0, %s174
    %s189 = sphi 0, %s175
    %s193 = sphi 0, %s193
    %s195 = sphi 0, %s193
    %s196 = sphi 0, %s195
    %s210 = sphi 0, %s196
    %s214 = sphi 0, %s214
    %s216 = sphi 0, %s214
    %s217 = sphi 0, %s216
    %s231 = sphi 0, %s217
    %s235 = sphi 0, %s235
    %s237 = sphi 0, %s235
    %s238 = sphi 0, %s237
    %s252 = sphi 0, %s238
    %s256 = sphi 0, %s256
    %s258 = sphi 0, %s256
    %s259 = sphi 0, %s258
    %s273 = sphi 0, %s259
    %s277 = sphi 0, %s277
    %s279 = sphi 0, %s277
    %s280 = sphi 0, %s279
    %s294 = sphi 0, %s280
    %s298 = sphi 0, %s298
    %s300 = sphi 0, %s298
    %s301 = sphi 0, %s300
    %s315 = sphi 0, %s301
    %s319 = sphi 0, %s319
    %s321 = sphi 0, %s319
    %s322 = sphi 0, %s321
    %s336 = sphi 0, %s322
    %s340 = sphi 0, %s340
    %s342 = sphi 0, %s340
    %s343 = sphi 0, %s342
    %s357 = sphi 0, %s343
    %s361 = sphi 0, %s361
    %s363 = sphi 0, %s361
    %s364 = sphi 0, %s363
    %s378 = sphi 0, %s364
    %s382 = sphi 0, %s382
    %s384 = sphi 0, %s382
    %s385 = sphi 0, %s384
    %s399 = sphi 0, %s385
    %s405 = sphi 0, %s407
    %s408 = sphi 0, %s405
    %s409 = sphi 0, %s408
    %s425 = sphi 0, %s409
    %s431 = sphi 0, %s433
    %s434 = sphi 0, %s431
    %s435 = sphi 0, %s434
    %s451 = sphi 0, %s435
    %s457 = sphi 0, %s459
    %s460 = sphi 0, %s457
    %s461 = sphi 0, %s460
    %s477 = sphi 0, %s461
    %s483 = sphi 0, %s485
    %s486 = sphi 0, %s483
    %s487 = sphi 0, %s486
    %s503 = sphi 0, %s487
    %s509 = sphi 0, %s511
    %s512 = sphi 0, %s509
    %s513 = sphi 0, %s512
    %s529 = sphi 0, %s513
  $region4: #{tpu_custom_call.1} parent=0 // loop_header_branch
    %31 = sbr.rel (%p29) target = $region8
  $region5: #{tpu_custom_call.1} parent=0 // loop_body
    %s33 = ssub.s32 %s28, 1
    %s34 = ssub.s32 %s28, 2
    %s35 = sadd.s32 %s28, 1
    %s36 = ssub.s32 %s28, %s35
    %p37 = scmp.eq.s32.totalorder %s36, 0
    %s39 = sadd.s32 %s38, 1
    %s40 = scalar_select %p37, %s38, %s39
    %p43 = pneg %p37
    %p44 = scmp.eq.s32.totalorder %s28, 1
    %p45 = por %p43, %p44
    %p46 = scmp.ne.s32.totalorder %s38, %s41
    %p47 = scmp.eq.s32.totalorder %s28, 0
    %p48 = por %p46, %p47
    %p49 = scmp.ne.s32.totalorder %s38, %s41
    %p50 = scmp.eq.s32.totalorder %s33, 1
    %p51 = por %p49, %p50
    %p52 = scmp.ne.s32.totalorder %s41, %s42
    %p53 = scmp.eq.s32.totalorder %s33, 0
    %p54 = por %p52, %p53
    %p55 = scmp.ne.s32.totalorder %s41, %s42
    %p56 = scmp.eq.s32.totalorder %s34, 1
    %p57 = por %p55, %p56
    %p59 = scmp.ne.s32.totalorder %s42, %s58
    %p60 = scmp.eq.s32.totalorder %s34, 0
    %p61 = por %p59, %p60
    %s62 = ssub.s32 %s28, %s35
    %p63 = scmp.eq.s32.totalorder %s62, 0
    %s65 = sadd.s32 %s64, 1
    %s66 = scalar_select %p63, %s64, %s65
    %p69 = pneg %p63
    %p70 = scmp.eq.s32.totalorder %s28, 1
    %p71 = por %p69, %p70
    %p72 = scmp.ne.s32.totalorder %s64, %s67
    %p73 = scmp.eq.s32.totalorder %s28, 0
    %p74 = por %p72, %p73
    %p75 = scmp.ne.s32.totalorder %s64, %s67
    %p76 = scmp.eq.s32.totalorder %s33, 1
    %p77 = por %p75, %p76
    %p78 = scmp.ne.s32.totalorder %s67, %s68
    %p79 = scmp.eq.s32.totalorder %s33, 0
    %p80 = por %p78, %p79
    %p81 = scmp.ne.s32.totalorder %s67, %s68
    %p82 = scmp.eq.s32.totalorder %s34, 1
    %p83 = por %p81, %p82
    %p85 = scmp.ne.s32.totalorder %s68, %s84
    %p86 = scmp.eq.s32.totalorder %s34, 0
    %p87 = por %p85, %p86
    %s89 = sadd.s32 %s88, 1
    %p92 = scmp.eq.s32.totalorder %s28, 1
    %p93 = scmp.ne.s32.totalorder %s88, %s90
    %p94 = scmp.eq.s32.totalorder %s28, 0
    %p95 = por %p93, %p94
    %p96 = scmp.ne.s32.totalorder %s88, %s90
    %p97 = scmp.eq.s32.totalorder %s33, 1
    %p98 = por %p96, %p97
    %p99 = scmp.ne.s32.totalorder %s90, %s91
    %p100 = scmp.eq.s32.totalorder %s33, 0
    %p101 = por %p99, %p100
    %p102 = scmp.ne.s32.totalorder %s90, %s91
    %p103 = scmp.eq.s32.totalorder %s34, 1
    %p104 = por %p102, %p103
    %p106 = scmp.ne.s32.totalorder %s91, %s105
    %p107 = scmp.eq.s32.totalorder %s34, 0
    %p108 = por %p106, %p107
    %s110 = sadd.s32 %s109, 1
    %p113 = scmp.eq.s32.totalorder %s28, 1
    %p114 = scmp.ne.s32.totalorder %s109, %s111
    %p115 = scmp.eq.s32.totalorder %s28, 0
    %p116 = por %p114, %p115
    %p117 = scmp.ne.s32.totalorder %s109, %s111
    %p118 = scmp.eq.s32.totalorder %s33, 1
    %p119 = por %p117, %p118
    %p120 = scmp.ne.s32.totalorder %s111, %s112
    %p121 = scmp.eq.s32.totalorder %s33, 0
    %p122 = por %p120, %p121
    %p123 = scmp.ne.s32.totalorder %s111, %s112
    %p124 = scmp.eq.s32.totalorder %s34, 1
    %p125 = por %p123, %p124
    %p127 = scmp.ne.s32.totalorder %s112, %s126
    %p128 = scmp.eq.s32.totalorder %s34, 0
    %p129 = por %p127, %p128
    %s131 = sadd.s32 %s130, 1
    %p134 = scmp.eq.s32.totalorder %s28, 1
    %p135 = scmp.ne.s32.totalorder %s130, %s132
    %p136 = scmp.eq.s32.totalorder %s28, 0
    %p137 = por %p135, %p136
    %p138 = scmp.ne.s32.totalorder %s130, %s132
    %p139 = scmp.eq.s32.totalorder %s33, 1
    %p140 = por %p138, %p139
    %p141 = scmp.ne.s32.totalorder %s132, %s133
    %p142 = scmp.eq.s32.totalorder %s33, 0
    %p143 = por %p141, %p142
    %p144 = scmp.ne.s32.totalorder %s132, %s133
    %p145 = scmp.eq.s32.totalorder %s34, 1
    %p146 = por %p144, %p145
    %p148 = scmp.ne.s32.totalorder %s133, %s147
    %p149 = scmp.eq.s32.totalorder %s34, 0
    %p150 = por %p148, %p149
    %s152 = sadd.s32 %s151, 1
    %p155 = scmp.eq.s32.totalorder %s28, 1
    %p156 = scmp.ne.s32.totalorder %s151, %s153
    %p157 = scmp.eq.s32.totalorder %s28, 0
    %p158 = por %p156, %p157
    %p159 = scmp.ne.s32.totalorder %s151, %s153
    %p160 = scmp.eq.s32.totalorder %s33, 1
    %p161 = por %p159, %p160
    %p162 = scmp.ne.s32.totalorder %s153, %s154
    %p163 = scmp.eq.s32.totalorder %s33, 0
    %p164 = por %p162, %p163
    %p165 = scmp.ne.s32.totalorder %s153, %s154
    %p166 = scmp.eq.s32.totalorder %s34, 1
    %p167 = por %p165, %p166
    %p169 = scmp.ne.s32.totalorder %s154, %s168
    %p170 = scmp.eq.s32.totalorder %s34, 0
    %p171 = por %p169, %p170
    %s173 = sadd.s32 %s172, 1
    %p176 = scmp.eq.s32.totalorder %s28, 1
    %p177 = scmp.ne.s32.totalorder %s172, %s174
    %p178 = scmp.eq.s32.totalorder %s28, 0
    %p179 = por %p177, %p178
    %p180 = scmp.ne.s32.totalorder %s172, %s174
    %p181 = scmp.eq.s32.totalorder %s33, 1
    %p182 = por %p180, %p181
    %p183 = scmp.ne.s32.totalorder %s174, %s175
    %p184 = scmp.eq.s32.totalorder %s33, 0
    %p185 = por %p183, %p184
    %p186 = scmp.ne.s32.totalorder %s174, %s175
    %p187 = scmp.eq.s32.totalorder %s34, 1
    %p188 = por %p186, %p187
    %p190 = scmp.ne.s32.totalorder %s175, %s189
    %p191 = scmp.eq.s32.totalorder %s34, 0
    %p192 = por %p190, %p191
    %s194 = sadd.s32 %s193, 1
    %p197 = scmp.eq.s32.totalorder %s28, 1
    %p198 = scmp.ne.s32.totalorder %s193, %s195
    %p199 = scmp.eq.s32.totalorder %s28, 0
    %p200 = por %p198, %p199
    %p201 = scmp.ne.s32.totalorder %s193, %s195
    %p202 = scmp.eq.s32.totalorder %s33, 1
    %p203 = por %p201, %p202
    %p204 = scmp.ne.s32.totalorder %s195, %s196
    %p205 = scmp.eq.s32.totalorder %s33, 0
    %p206 = por %p204, %p205
    %p207 = scmp.ne.s32.totalorder %s195, %s196
    %p208 = scmp.eq.s32.totalorder %s34, 1
    %p209 = por %p207, %p208
    %p211 = scmp.ne.s32.totalorder %s196, %s210
    %p212 = scmp.eq.s32.totalorder %s34, 0
    %p213 = por %p211, %p212
    %s215 = sadd.s32 %s214, 1
    %p218 = scmp.eq.s32.totalorder %s28, 1
    %p219 = scmp.ne.s32.totalorder %s214, %s216
    %p220 = scmp.eq.s32.totalorder %s28, 0
    %p221 = por %p219, %p220
    %p222 = scmp.ne.s32.totalorder %s214, %s216
    %p223 = scmp.eq.s32.totalorder %s33, 1
    %p224 = por %p222, %p223
    %p225 = scmp.ne.s32.totalorder %s216, %s217
    %p226 = scmp.eq.s32.totalorder %s33, 0
    %p227 = por %p225, %p226
    %p228 = scmp.ne.s32.totalorder %s216, %s217
    %p229 = scmp.eq.s32.totalorder %s34, 1
    %p230 = por %p228, %p229
    %p232 = scmp.ne.s32.totalorder %s217, %s231
    %p233 = scmp.eq.s32.totalorder %s34, 0
    %p234 = por %p232, %p233
    %s236 = sadd.s32 %s235, 1
    %p239 = scmp.eq.s32.totalorder %s28, 1
    %p240 = scmp.ne.s32.totalorder %s235, %s237
    %p241 = scmp.eq.s32.totalorder %s28, 0
    %p242 = por %p240, %p241
    %p243 = scmp.ne.s32.totalorder %s235, %s237
    %p244 = scmp.eq.s32.totalorder %s33, 1
    %p245 = por %p243, %p244
    %p246 = scmp.ne.s32.totalorder %s237, %s238
    %p247 = scmp.eq.s32.totalorder %s33, 0
    %p248 = por %p246, %p247
    %p249 = scmp.ne.s32.totalorder %s237, %s238
    %p250 = scmp.eq.s32.totalorder %s34, 1
    %p251 = por %p249, %p250
    %p253 = scmp.ne.s32.totalorder %s238, %s252
    %p254 = scmp.eq.s32.totalorder %s34, 0
    %p255 = por %p253, %p254
    %s257 = sadd.s32 %s256, 1
    %p260 = scmp.eq.s32.totalorder %s28, 1
    %p261 = scmp.ne.s32.totalorder %s256, %s258
    %p262 = scmp.eq.s32.totalorder %s28, 0
    %p263 = por %p261, %p262
    %p264 = scmp.ne.s32.totalorder %s256, %s258
    %p265 = scmp.eq.s32.totalorder %s33, 1
    %p266 = por %p264, %p265
    %p267 = scmp.ne.s32.totalorder %s258, %s259
    %p268 = scmp.eq.s32.totalorder %s33, 0
    %p269 = por %p267, %p268
    %p270 = scmp.ne.s32.totalorder %s258, %s259
    %p271 = scmp.eq.s32.totalorder %s34, 1
    %p272 = por %p270, %p271
    %p274 = scmp.ne.s32.totalorder %s259, %s273
    %p275 = scmp.eq.s32.totalorder %s34, 0
    %p276 = por %p274, %p275
    %s278 = sadd.s32 %s277, 1
    %p281 = scmp.eq.s32.totalorder %s28, 1
    %p282 = scmp.ne.s32.totalorder %s277, %s279
    %p283 = scmp.eq.s32.totalorder %s28, 0
    %p284 = por %p282, %p283
    %p285 = scmp.ne.s32.totalorder %s277, %s279
    %p286 = scmp.eq.s32.totalorder %s33, 1
    %p287 = por %p285, %p286
    %p288 = scmp.ne.s32.totalorder %s279, %s280
    %p289 = scmp.eq.s32.totalorder %s33, 0
    %p290 = por %p288, %p289
    %p291 = scmp.ne.s32.totalorder %s279, %s280
    %p292 = scmp.eq.s32.totalorder %s34, 1
    %p293 = por %p291, %p292
    %p295 = scmp.ne.s32.totalorder %s280, %s294
    %p296 = scmp.eq.s32.totalorder %s34, 0
    %p297 = por %p295, %p296
    %s299 = sadd.s32 %s298, 1
    %p302 = scmp.eq.s32.totalorder %s28, 1
    %p303 = scmp.ne.s32.totalorder %s298, %s300
    %p304 = scmp.eq.s32.totalorder %s28, 0
    %p305 = por %p303, %p304
    %p306 = scmp.ne.s32.totalorder %s298, %s300
    %p307 = scmp.eq.s32.totalorder %s33, 1
    %p308 = por %p306, %p307
    %p309 = scmp.ne.s32.totalorder %s300, %s301
    %p310 = scmp.eq.s32.totalorder %s33, 0
    %p311 = por %p309, %p310
    %p312 = scmp.ne.s32.totalorder %s300, %s301
    %p313 = scmp.eq.s32.totalorder %s34, 1
    %p314 = por %p312, %p313
    %p316 = scmp.ne.s32.totalorder %s301, %s315
    %p317 = scmp.eq.s32.totalorder %s34, 0
    %p318 = por %p316, %p317
    %s320 = sadd.s32 %s319, 1
    %p323 = scmp.eq.s32.totalorder %s28, 1
    %p324 = scmp.ne.s32.totalorder %s319, %s321
    %p325 = scmp.eq.s32.totalorder %s28, 0
    %p326 = por %p324, %p325
    %p327 = scmp.ne.s32.totalorder %s319, %s321
    %p328 = scmp.eq.s32.totalorder %s33, 1
    %p329 = por %p327, %p328
    %p330 = scmp.ne.s32.totalorder %s321, %s322
    %p331 = scmp.eq.s32.totalorder %s33, 0
    %p332 = por %p330, %p331
    %p333 = scmp.ne.s32.totalorder %s321, %s322
    %p334 = scmp.eq.s32.totalorder %s34, 1
    %p335 = por %p333, %p334
    %p337 = scmp.ne.s32.totalorder %s322, %s336
    %p338 = scmp.eq.s32.totalorder %s34, 0
    %p339 = por %p337, %p338
    %s341 = sadd.s32 %s340, 1
    %p344 = scmp.eq.s32.totalorder %s28, 1
    %p345 = scmp.ne.s32.totalorder %s340, %s342
    %p346 = scmp.eq.s32.totalorder %s28, 0
    %p347 = por %p345, %p346
    %p348 = scmp.ne.s32.totalorder %s340, %s342
    %p349 = scmp.eq.s32.totalorder %s33, 1
    %p350 = por %p348, %p349
    %p351 = scmp.ne.s32.totalorder %s342, %s343
    %p352 = scmp.eq.s32.totalorder %s33, 0
    %p353 = por %p351, %p352
    %p354 = scmp.ne.s32.totalorder %s342, %s343
    %p355 = scmp.eq.s32.totalorder %s34, 1
    %p356 = por %p354, %p355
    %p358 = scmp.ne.s32.totalorder %s343, %s357
    %p359 = scmp.eq.s32.totalorder %s34, 0
    %p360 = por %p358, %p359
    %s362 = sadd.s32 %s361, 1
    %p365 = scmp.eq.s32.totalorder %s28, 1
    %p366 = scmp.ne.s32.totalorder %s361, %s363
    %p367 = scmp.eq.s32.totalorder %s28, 0
    %p368 = por %p366, %p367
    %p369 = scmp.ne.s32.totalorder %s361, %s363
    %p370 = scmp.eq.s32.totalorder %s33, 1
    %p371 = por %p369, %p370
    %p372 = scmp.ne.s32.totalorder %s363, %s364
    %p373 = scmp.eq.s32.totalorder %s33, 0
    %p374 = por %p372, %p373
    %p375 = scmp.ne.s32.totalorder %s363, %s364
    %p376 = scmp.eq.s32.totalorder %s34, 1
    %p377 = por %p375, %p376
    %p379 = scmp.ne.s32.totalorder %s364, %s378
    %p380 = scmp.eq.s32.totalorder %s34, 0
    %p381 = por %p379, %p380
    %s383 = sadd.s32 %s382, 1
    %p386 = scmp.eq.s32.totalorder %s28, 1
    %p387 = scmp.ne.s32.totalorder %s382, %s384
    %p388 = scmp.eq.s32.totalorder %s28, 0
    %p389 = por %p387, %p388
    %p390 = scmp.ne.s32.totalorder %s382, %s384
    %p391 = scmp.eq.s32.totalorder %s33, 1
    %p392 = por %p390, %p391
    %p393 = scmp.ne.s32.totalorder %s384, %s385
    %p394 = scmp.eq.s32.totalorder %s33, 0
    %p395 = por %p393, %p394
    %p396 = scmp.ne.s32.totalorder %s384, %s385
    %p397 = scmp.eq.s32.totalorder %s34, 1
    %p398 = por %p396, %p397
    %p400 = scmp.ne.s32.totalorder %s385, %s399
    %p401 = scmp.eq.s32.totalorder %s34, 0
    %p402 = por %p400, %p401
    %s403 = ssub.s32 %s28, %s35
    %p404 = scmp.eq.s32.totalorder %s403, 0
    %s406 = sadd.s32 %s405, 1
    %s407 = scalar_select %p404, %s405, %s406
    %p410 = pneg %p404
    %p411 = scmp.eq.s32.totalorder %s28, 1
    %p412 = por %p410, %p411
    %p413 = scmp.ne.s32.totalorder %s405, %s408
    %p414 = scmp.eq.s32.totalorder %s28, 0
    %p415 = por %p413, %p414
    %p416 = scmp.ne.s32.totalorder %s405, %s408
    %p417 = scmp.eq.s32.totalorder %s33, 1
    %p418 = por %p416, %p417
    %p419 = scmp.ne.s32.totalorder %s408, %s409
    %p420 = scmp.eq.s32.totalorder %s33, 0
    %p421 = por %p419, %p420
    %p422 = scmp.ne.s32.totalorder %s408, %s409
    %p423 = scmp.eq.s32.totalorder %s34, 1
    %p424 = por %p422, %p423
    %p426 = scmp.ne.s32.totalorder %s409, %s425
    %p427 = scmp.eq.s32.totalorder %s34, 0
    %p428 = por %p426, %p427
    %s429 = ssub.s32 %s28, %s35
    %p430 = scmp.eq.s32.totalorder %s429, 0
    %s432 = sadd.s32 %s431, 1
    %s433 = scalar_select %p430, %s431, %s432
    %p436 = pneg %p430
    %p437 = scmp.eq.s32.totalorder %s28, 1
    %p438 = por %p436, %p437
    %p439 = scmp.ne.s32.totalorder %s431, %s434
    %p440 = scmp.eq.s32.totalorder %s28, 0
    %p441 = por %p439, %p440
    %p442 = scmp.ne.s32.totalorder %s431, %s434
    %p443 = scmp.eq.s32.totalorder %s33, 1
    %p444 = por %p442, %p443
    %p445 = scmp.ne.s32.totalorder %s434, %s435
    %p446 = scmp.eq.s32.totalorder %s33, 0
    %p447 = por %p445, %p446
    %p448 = scmp.ne.s32.totalorder %s434, %s435
    %p449 = scmp.eq.s32.totalorder %s34, 1
    %p450 = por %p448, %p449
    %p452 = scmp.ne.s32.totalorder %s435, %s451
    %p453 = scmp.eq.s32.totalorder %s34, 0
    %p454 = por %p452, %p453
    %s455 = ssub.s32 %s28, %s35
    %p456 = scmp.eq.s32.totalorder %s455, 0
    %s458 = sadd.s32 %s457, 1
    %s459 = scalar_select %p456, %s457, %s458
    %p462 = pneg %p456
    %p463 = scmp.eq.s32.totalorder %s28, 1
    %p464 = por %p462, %p463
    %p465 = scmp.ne.s32.totalorder %s457, %s460
    %p466 = scmp.eq.s32.totalorder %s28, 0
    %p467 = por %p465, %p466
    %p468 = scmp.ne.s32.totalorder %s457, %s460
    %p469 = scmp.eq.s32.totalorder %s33, 1
    %p470 = por %p468, %p469
    %p471 = scmp.ne.s32.totalorder %s460, %s461
    %p472 = scmp.eq.s32.totalorder %s33, 0
    %p473 = por %p471, %p472
    %p474 = scmp.ne.s32.totalorder %s460, %s461
    %p475 = scmp.eq.s32.totalorder %s34, 1
    %p476 = por %p474, %p475
    %p478 = scmp.ne.s32.totalorder %s461, %s477
    %p479 = scmp.eq.s32.totalorder %s34, 0
    %p480 = por %p478, %p479
    %s481 = ssub.s32 %s28, %s35
    %p482 = scmp.eq.s32.totalorder %s481, 0
    %s484 = sadd.s32 %s483, 1
    %s485 = scalar_select %p482, %s483, %s484
    %p488 = pneg %p482
    %p489 = scmp.eq.s32.totalorder %s28, 1
    %p490 = por %p488, %p489
    %p491 = scmp.ne.s32.totalorder %s483, %s486
    %p492 = scmp.eq.s32.totalorder %s28, 0
    %p493 = por %p491, %p492
    %p494 = scmp.ne.s32.totalorder %s483, %s486
    %p495 = scmp.eq.s32.totalorder %s33, 1
    %p496 = por %p494, %p495
    %p497 = scmp.ne.s32.totalorder %s486, %s487
    %p498 = scmp.eq.s32.totalorder %s33, 0
    %p499 = por %p497, %p498
    %p500 = scmp.ne.s32.totalorder %s486, %s487
    %p501 = scmp.eq.s32.totalorder %s34, 1
    %p502 = por %p500, %p501
    %p504 = scmp.ne.s32.totalorder %s487, %s503
    %p505 = scmp.eq.s32.totalorder %s34, 0
    %p506 = por %p504, %p505
    %s507 = ssub.s32 %s28, %s35
    %p508 = scmp.eq.s32.totalorder %s507, 0
    %s510 = sadd.s32 %s509, 1
    %s511 = scalar_select %p508, %s509, %s510
    %p514 = pneg %p508
    %p515 = scmp.eq.s32.totalorder %s28, 1
    %p516 = por %p514, %p515
    %p517 = scmp.ne.s32.totalorder %s509, %s512
    %p518 = scmp.eq.s32.totalorder %s28, 0
    %p519 = por %p517, %p518
    %p520 = scmp.ne.s32.totalorder %s509, %s512
    %p521 = scmp.eq.s32.totalorder %s33, 1
    %p522 = por %p520, %p521
    %p523 = scmp.ne.s32.totalorder %s512, %s513
    %p524 = scmp.eq.s32.totalorder %s33, 0
    %p525 = por %p523, %p524
    %p526 = scmp.ne.s32.totalorder %s512, %s513
    %p527 = scmp.eq.s32.totalorder %s34, 1
    %p528 = por %p526, %p527
    %p530 = scmp.ne.s32.totalorder %s513, %s529
    %p531 = scmp.eq.s32.totalorder %s34, 0
    %p532 = por %p530, %p531
    %p533 = scmp.le.s32.totalorder 1, %s28
    %p534 = scmp.lt.s32.totalorder %s28, 3
    %p535 = pnand %p533, %p534
    %p536 = pneg %p535
    // Predicated region
    $region9: #{tpu_custom_call.1} parent=5 // pred_check
      _
    $region10: #{tpu_custom_call.1} parent=5 // pred_check_branch
      %538 = sbr.rel (%p535) target = $region12
    $region11: #{tpu_custom_call.1} parent=5 // pred_region
      %s539 = ssub.s32 %s28, 1
      // Predicated region
      $region13: #{tpu_custom_call.1} parent=11 // pred_check
        %p540 = pneg %p101
      $region14: #{tpu_custom_call.1} parent=11 // pred_check_branch
        %542 = sbr.rel (%p540) target = $region16
      $region15: #{tpu_custom_call.1} parent=11 // pred_region
        _
      $region16: #{tpu_custom_call.1} parent=11 // pred_fallthru
        _
      // Predicated region
      $region17: #{tpu_custom_call.1} parent=11 // pred_check
        %p543 = pneg %p122
      $region18: #{tpu_custom_call.1} parent=11 // pred_check_branch
        %545 = sbr.rel (%p543) target = $region20
      $region19: #{tpu_custom_call.1} parent=11 // pred_region
        _
      $region20: #{tpu_custom_call.1} parent=11 // pred_fallthru
        _
      // Predicated region
      $region21: #{tpu_custom_call.1} parent=11 // pred_check
        %p546 = pneg %p143
      $region22: #{tpu_custom_call.1} parent=11 // pred_check_branch
        %548 = sbr.rel (%p546) target = $region24
      $region23: #{tpu_custom_call.1} parent=11 // pred_region
        _
      $region24: #{tpu_custom_call.1} parent=11 // pred_fallthru
        _
      // Predicated region
      $region25: #{tpu_custom_call.1} parent=11 // pred_check
        %p549 = pneg %p164
      $region26: #{tpu_custom_call.1} parent=11 // pred_check_branch
        %551 = sbr.rel (%p549) target = $region28
      $region27: #{tpu_custom_call.1} parent=11 // pred_region
        _
      $region28: #{tpu_custom_call.1} parent=11 // pred_fallthru
        _
      // Predicated region
      $region29: #{tpu_custom_call.1} parent=11 // pred_check
        %p552 = pneg %p185
      $region30: #{tpu_custom_call.1} parent=11 // pred_check_branch
        %554 = sbr.rel (%p552) target = $region32
      $region31: #{tpu_custom_call.1} parent=11 // pred_region
        _
      $region32: #{tpu_custom_call.1} parent=11 // pred_fallthru
        _
      // Predicated region
      $region33: #{tpu_custom_call.1} parent=11 // pred_check
        %p555 = pneg %p206
      $region34: #{tpu_custom_call.1} parent=11 // pred_check_branch
        %557 = sbr.rel (%p555) target = $region36
      $region35: #{tpu_custom_call.1} parent=11 // pred_region
        _
      $region36: #{tpu_custom_call.1} parent=11 // pred_fallthru
        _
      // Predicated region
      $region37: #{tpu_custom_call.1} parent=11 // pred_check
        %p558 = pneg %p227
      $region38: #{tpu_custom_call.1} parent=11 // pred_check_branch
        %560 = sbr.rel (%p558) target = $region40
      $region39: #{tpu_custom_call.1} parent=11 // pred_region
        _
      $region40: #{tpu_custom_call.1} parent=11 // pred_fallthru
        _
      // Predicated region
      $region41: #{tpu_custom_call.1} parent=11 // pred_check
        %p561 = pneg %p248
      $region42: #{tpu_custom_call.1} parent=11 // pred_check_branch
        %563 = sbr.rel (%p561) target = $region44
      $region43: #{tpu_custom_call.1} parent=11 // pred_region
        _
      $region44: #{tpu_custom_call.1} parent=11 // pred_fallthru
        _
      // Predicated region
      $region45: #{tpu_custom_call.1} parent=11 // pred_check
        %p564 = pneg %p269
      $region46: #{tpu_custom_call.1} parent=11 // pred_check_branch
        %566 = sbr.rel (%p564) target = $region48
      $region47: #{tpu_custom_call.1} parent=11 // pred_region
        _
      $region48: #{tpu_custom_call.1} parent=11 // pred_fallthru
        _
      // Predicated region
      $region49: #{tpu_custom_call.1} parent=11 // pred_check
        %p567 = pneg %p290
      $region50: #{tpu_custom_call.1} parent=11 // pred_check_branch
        %569 = sbr.rel (%p567) target = $region52
      $region51: #{tpu_custom_call.1} parent=11 // pred_region
        _
      $region52: #{tpu_custom_call.1} parent=11 // pred_fallthru
        _
      // Predicated region
      $region53: #{tpu_custom_call.1} parent=11 // pred_check
        %p570 = pneg %p311
      $region54: #{tpu_custom_call.1} parent=11 // pred_check_branch
        %572 = sbr.rel (%p570) target = $region56
      $region55: #{tpu_custom_call.1} parent=11 // pred_region
        _
      $region56: #{tpu_custom_call.1} parent=11 // pred_fallthru
        _
      // Predicated region
      $region57: #{tpu_custom_call.1} parent=11 // pred_check
        %p573 = pneg %p332
      $region58: #{tpu_custom_call.1} parent=11 // pred_check_branch
        %575 = sbr.rel (%p573) target = $region60
      $region59: #{tpu_custom_call.1} parent=11 // pred_region
        _
      $region60: #{tpu_custom_call.1} parent=11 // pred_fallthru
        _
      // Predicated region
      $region61: #{tpu_custom_call.1} parent=11 // pred_check
        %p576 = pneg %p353
      $region62: #{tpu_custom_call.1} parent=11 // pred_check_branch
        %578 = sbr.rel (%p576) target = $region64
      $region63: #{tpu_custom_call.1} parent=11 // pred_region
        _
      $region64: #{tpu_custom_call.1} parent=11 // pred_fallthru
        _
      // Predicated region
      $region65: #{tpu_custom_call.1} parent=11 // pred_check
        %p579 = pneg %p374
      $region66: #{tpu_custom_call.1} parent=11 // pred_check_branch
        %581 = sbr.rel (%p579) target = $region68
      $region67: #{tpu_custom_call.1} parent=11 // pred_region
        _
      $region68: #{tpu_custom_call.1} parent=11 // pred_fallthru
        _
      // Predicated region
      $region69: #{tpu_custom_call.1} parent=11 // pred_check
        %p582 = pneg %p395
      $region70: #{tpu_custom_call.1} parent=11 // pred_check_branch
        %584 = sbr.rel (%p582) target = $region72
      $region71: #{tpu_custom_call.1} parent=11 // pred_region
        _
      $region72: #{tpu_custom_call.1} parent=11 // pred_fallthru
        _
    $region12: #{tpu_custom_call.1} parent=5 // pred_fallthru
      _
    %p585 = scmp.lt.s32.totalorder %s28, 2
    // Predicated region
    $region73: #{tpu_custom_call.1} parent=5 // pred_check
      %p586 = pneg %p585
    $region74: #{tpu_custom_call.1} parent=5 // pred_check_branch
      %588 = sbr.rel (%p586) target = $region76
    $region75: #{tpu_custom_call.1} parent=5 // pred_region
      // Predicated region
      $region77: #{tpu_custom_call.1} parent=75 // pred_check
        %p589 = pneg %p48
      $region78: #{tpu_custom_call.1} parent=75 // pred_check_branch
        %591 = sbr.rel (%p589) target = $region80
      $region79: #{tpu_custom_call.1} parent=75 // pred_region
        %p592 = scmp.lt.s32.totalorder %s28, 1
        %s593 = scalar_select %p592, %s28, 1
        %s594 = smul.addr %s593, 2
        %s595 = smul.addr %s594, 4
        %s596 = scalar_lea.vmem %s0, %s595
      $region80: #{tpu_custom_call.1} parent=75 // pred_fallthru
        _
      // Predicated region
      $region81: #{tpu_custom_call.1} parent=75 // pred_check
        %p597 = pneg %p74
      $region82: #{tpu_custom_call.1} parent=75 // pred_check_branch
        %599 = sbr.rel (%p597) target = $region84
      $region83: #{tpu_custom_call.1} parent=75 // pred_region
        %p600 = scmp.lt.s32.totalorder %s28, 1
        %s601 = scalar_select %p600, %s28, 1
        %s602 = smul.addr %s601, 2
        %s603 = scalar_lea.vmem %s1, %s602
      $region84: #{tpu_custom_call.1} parent=75 // pred_fallthru
        _
    $region76: #{tpu_custom_call.1} parent=5 // pred_fallthru
      _
    %p604 = scmp.le.s32.totalorder 1, %s28
    %p605 = scmp.lt.s32.totalorder %s28, 3
    %p606 = pnand %p604, %p605
    %p607 = pneg %p606
    // Predicated region
    $region85: #{tpu_custom_call.1} parent=5 // pred_check
      _
    $region86: #{tpu_custom_call.1} parent=5 // pred_check_branch
      %609 = sbr.rel (%p606) target = $region88
    $region87: #{tpu_custom_call.1} parent=5 // pred_region
      %s610 = ssub.s32 %s28, 1
      %p611 = scmp.lt.s32.totalorder %s33, 1
      %s612 = scalar_select %p611, %s33, 1
      %s613 = smul.addr %s612, 2
      %s614 = smul.addr %s613, 4
      %s615 = scalar_lea.vmem %s0, %s614
      %p616 = pneg %p54
      %p617 = pneg %p51
      %p618 = scmp.lt.s32.totalorder %s33, 1
      %s619 = scalar_select %p618, %s33, 1
      %s620 = smul.addr %s619, 2
      %s621 = scalar_lea.vmem %s1, %s620
      %p622 = pneg %p80
      %p623 = pneg %p77
      %p624 = pneg %p101
      %p625 = pneg %p98
      %p626 = pneg %p122
      %p627 = pneg %p119
      %p628 = pneg %p143
      %p629 = pneg %p140
      %p630 = pneg %p164
      %p631 = pneg %p161
      %p632 = pneg %p185
      %p633 = pneg %p182
      %p634 = pneg %p206
      %p635 = pneg %p203
      %p636 = pneg %p227
      %p637 = pneg %p224
      %p638 = pneg %p248
      %p639 = pneg %p245
      %p640 = pneg %p269
      %p641 = pneg %p266
      %p642 = pneg %p290
      %p643 = pneg %p287
      %p644 = pneg %p311
      %p645 = pneg %p308
      %p646 = pneg %p332
      %p647 = pneg %p329
      %p648 = pneg %p353
      %p649 = pneg %p350
      %p650 = pneg %p374
      %p651 = pneg %p371
      %p652 = pneg %p395
      %p653 = pneg %p392
      %p654 = pneg %p421
      %p655 = pneg %p418
      %p656 = scmp.lt.s32.totalorder %s33, 1
      %s657 = scalar_select %p656, %s33, 1
      %s658 = smul.addr %s657, 2
      %s659 = smul.addr %s658, 4
      %s660 = scalar_lea.vmem %s17, %s659
      %p661 = pneg %p447
      %p662 = pneg %p444
      %p663 = scmp.lt.s32.totalorder %s33, 1
      %s664 = scalar_select %p663, %s33, 1
      %s665 = smul.addr %s664, 2
      %s666 = smul.addr %s665, 4
      %s667 = scalar_lea.vmem %s18, %s666
      %p668 = pneg %p473
      %p669 = pneg %p470
      %p670 = scmp.lt.s32.totalorder %s33, 1
      %s671 = scalar_select %p670, %s33, 1
      %s672 = smul.addr %s671, 2
      %s673 = smul.addr %s672, 4
      %s674 = scalar_lea.vmem %s19, %s673
      %p675 = pneg %p499
      %p676 = pneg %p496
      %p677 = scmp.lt.s32.totalorder %s33, 1
      %s678 = scalar_select %p677, %s33, 1
      %s679 = smul.addr %s678, 2
      %s680 = smul.addr %s679, 4
      %s681 = scalar_lea.vmem %s20, %s680
      %p682 = pneg %p525
      %p683 = pneg %p522
      %p684 = scmp.lt.s32.totalorder %s33, 1
      %s685 = scalar_select %p684, %s33, 1
      %s686 = smul.addr %s685, 2
      %s687 = smul.addr %s686, 4
      %s688 = scalar_lea.vmem %s21, %s687
      %p689 = scmp.lt.s32.totalorder %s33, 1
      %s690 = scalar_select %p689, %s33, 1
      %s691 = smul.addr %s690, 2
      %s692 = smul.addr %s691, 4
      %s693 = scalar_lea.vmem %s0, %s692
      %p694 = scmp.lt.s32.totalorder %s33, 1
      %s695 = scalar_select %p694, %s33, 1
      %s696 = smul.addr %s695, 2
      %s697 = scalar_lea.vmem %s1, %s696
      %p698 = scmp.lt.s32.totalorder %s33, 1
      %s699 = scalar_select %p698, %s33, 1
      %s700 = smul.addr %s699, 2
      %s701 = smul.addr %s700, 4
      %s702 = scalar_lea.vmem %s17, %s701
      %p703 = scmp.lt.s32.totalorder %s33, 1
      %s704 = scalar_select %p703, %s33, 1
      %s705 = smul.addr %s704, 2
      %s706 = smul.addr %s705, 4
      %s707 = scalar_lea.vmem %s18, %s706
      %p708 = scmp.lt.s32.totalorder %s33, 1
      %s709 = scalar_select %p708, %s33, 1
      %s710 = smul.addr %s709, 2
      %s711 = smul.addr %s710, 4
      %s712 = scalar_lea.vmem %s19, %s711
      %p713 = scmp.lt.s32.totalorder %s33, 1
      %s714 = scalar_select %p713, %s33, 1
      %s715 = smul.addr %s714, 2
      %s716 = smul.addr %s715, 4
      %s717 = scalar_lea.vmem %s20, %s716
      %p718 = scmp.lt.s32.totalorder %s33, 1
      %s719 = scalar_select %p718, %s33, 1
      %s720 = smul.addr %s719, 2
      %s721 = smul.addr %s720, 4
      %s722 = scalar_lea.vmem %s21, %s721
      %v723 = vld [vmem:[%s693] sm:$0x77]
      %v724 = vld [vmem:[%s697] sm:$0x3]
      %v725 = vsub.f32 1.0, %v724
      %v726 = vld [vmem:[%s2] sm:$0xff]
      %v727 = vld [vmem:[%s2 + $0x8] sm:$0xff]
      %v728 = vld [vmem:[%s2 + $0x10] sm:$0xff]
      %v729 = vld [vmem:[%s2 + $0x18] sm:$0xff]
      %v730 = vld [vmem:[%s3] sm:$0xff]
      %v731 = vld [vmem:[%s3 + $0x8] sm:$0xff]
      %v732 = vld [vmem:[%s3 + $0x10] sm:$0xff]
      %v733 = vld [vmem:[%s3 + $0x18] sm:$0xff]
      %735 = vset.pattern.permute.xlu0 0
      %736 = vperm.xlu0 %735, %v730
      %v737 = vpop.permute.xlu0 %736
      %740 = vset.pattern.permute.xlu0 0
      %741 = vperm.xlu0 %740, %v731
      %v742 = vpop.permute.xlu0 %741
      %745 = vset.pattern.permute.xlu0 0
      %746 = vperm.xlu0 %745, %v732
      %v747 = vpop.permute.xlu0 %746
      %750 = vset.pattern.permute.xlu0 0
      %751 = vperm.xlu0 %750, %v733
      %v752 = vpop.permute.xlu0 %751
      %v755 = vlaneseq
      %v756 = vshrl.u32 %v755, 7
      %v757 = vsub.s32 0, %v756
      %v758 = vrot.slane %v724, %v757
      %v759 = vlaneseq
      %v760 = vshrl.u32 %v759, 7
      %v761 = vsub.s32 1, %v760
      %v762 = vrot.slane %v724, %v761
      %v765 = vmul.f32 %v737, %v758
      %v766 = vmul.f32 %v737, %v762
      %v767 = vmul.f32 %v742, %v758
      %v768 = vmul.f32 %v742, %v762
      %v769 = vmul.f32 %v747, %v758
      %v770 = vmul.f32 %v747, %v762
      %v771 = vmul.f32 %v752, %v758
      %v772 = vmul.f32 %v752, %v762
      %v774 = vcombine.high %v723, %v723
      %vm775 = vcmask 23552
      %v777 = vsel %vm775, %v726, 0
      %v780 = vsel %vm775, %v727, 0
      %v783 = vsel %vm775, %v728, 0
      %v786 = vsel %vm775, %v729, 0
      %vm788 = vcmask 1042432
      %v789 = vsel %vm788, %v723, 0
      %v791 = vsel %vm788, %v774, 0
      %793 = vmatprep.subr.mxu0 %v791
      %794 = vmatpush1.msra.mxu0 %v789
      %795 = vmatprep.subr.mxu0 0.0
      %796 = vmatpush1.msra.mxu0 0.0
      %797 = vmatprep.subr.mxu0 0.0
      %798 = vmatpush1.msra.mxu0 0.0
      %799 = vmatprep.subr.mxu0 0.0
      %800 = vmatpush1.msra.mxu0 0.0
      %801 = vmatprep.subr.mxu0 0.0
      %802 = vmatpush1.msra.mxu0 0.0
      %803 = vmatprep.subr.mxu0 0.0
      %804 = vmatpush1.msra.mxu0 0.0
      %805 = vmatprep.subr.mxu0 0.0
      %806 = vmatpush1.msra.mxu0 0.0
      %807 = vmatprep.subr.mxu0 0.0
      %808 = vmatpush1.msra.mxu0 0.0
      %809 = vmatprep.subr.mxu0 0.0
      %810 = vmatpush1.msra.mxu0 0.0
      %811 = vmatprep.subr.mxu0 0.0
      %812 = vmatpush1.msra.mxu0 0.0
      %813 = vmatprep.subr.mxu0 0.0
      %814 = vmatpush1.msra.mxu0 0.0
      %815 = vmatprep.subr.mxu0 0.0
      %816 = vmatpush1.msra.mxu0 0.0
      %817 = vmatprep.subr.mxu0 0.0
      %818 = vmatpush1.msra.mxu0 0.0
      %819 = vmatprep.subr.mxu0 0.0
      %820 = vmatpush1.msra.mxu0 0.0
      %821 = vmatprep.subr.mxu0 0.0
      %822 = vmatpush1.msra.mxu0 0.0
      %823 = vmatprep.subr.mxu0 0.0
      %824 = vmatpush1.msra.mxu0 0.0
      %825 = vmatprep.subr.mxu0 0.0
      %826 = vmatpush1.msra.mxu0 0.0
      %827 = vmatprep.subr.mxu0 0.0
      %828 = vmatpush1.msra.mxu0 0.0
      %829 = vmatprep.subr.mxu0 0.0
      %830 = vmatpush1.msra.mxu0 0.0
      %831 = vmatprep.subr.mxu0 0.0
      %832 = vmatpush1.msra.mxu0 0.0
      %833 = vmatprep.subr.mxu0 0.0
      %834 = vmatpush1.msra.mxu0 0.0
      %835 = vmatprep.subr.mxu0 0.0
      %836 = vmatpush1.msra.mxu0 0.0
      %837 = vmatprep.subr.mxu0 0.0
      %838 = vmatpush1.msra.mxu0 0.0
      %839 = vmatprep.subr.mxu0 0.0
      %840 = vmatpush1.msra.mxu0 0.0
      %841 = vmatprep.subr.mxu0 0.0
      %842 = vmatpush1.msra.mxu0 0.0
      %843 = vmatprep.subr.mxu0 0.0
      %844 = vmatpush1.msra.mxu0 0.0
      %845 = vmatprep.subr.mxu0 0.0
      %846 = vmatpush1.msra.mxu0 0.0
      %847 = vmatprep.subr.mxu0 0.0
      %848 = vmatpush1.msra.mxu0 0.0
      %849 = vmatprep.subr.mxu0 0.0
      %850 = vmatpush1.msra.mxu0 0.0
      %851 = vmatprep.subr.mxu0 0.0
      %852 = vmatpush1.msra.mxu0 0.0
      %853 = vmatprep.subr.mxu0 0.0
      %854 = vmatpush1.msra.mxu0 0.0
      %855 = vmatprep.subr.mxu0 0.0
      %856 = vmatpush1.msra.mxu0 0.0
      %857 = vmatprep.mubr.f32.mxu0 0.0
      %858 = vmatmul.mubr.f32.gmra.mrb[0].mxu0 %v777
      %v859 = vpop.f32.mrb[0].mxu0
      %v860 = vadd.f32 %v765, %v859
      %v861 = vpop.f32.mrb[0].mxu0
      %v862 = vadd.f32 %v766, %v861
      %863 = vmatprep.mubr.f32.mxu0 0.0
      %864 = vmatmul.mubr.f32.gmra.mrb[0].mxu0 %v780
      %v865 = vpop.f32.mrb[0].mxu0
      %v866 = vadd.f32 %v767, %v865
      %v867 = vpop.f32.mrb[0].mxu0
      %v868 = vadd.f32 %v768, %v867
      %869 = vmatprep.mubr.f32.mxu0 0.0
      %870 = vmatmul.mubr.f32.gmra.mrb[0].mxu0 %v783
      %v871 = vpop.f32.mrb[0].mxu0
      %v872 = vadd.f32 %v769, %v871
      %v873 = vpop.f32.mrb[0].mxu0
      %v874 = vadd.f32 %v770, %v873
      %875 = vmatprep.mubr.f32.mxu0 0.0
      %876 = vmatmul.mubr.f32.gmra.mrb[0].mxu0 %v786
      %v877 = vpop.f32.mrb[0].mxu0
      %v878 = vadd.f32 %v771, %v877
      %v879 = vpop.f32.mrb[0].mxu0
      %v880 = vadd.f32 %v772, %v879
      %881 = vdwg.mxu0
      %v882 = vld [vmem:[%s4] sm:$0xff]
      %v883 = vld [vmem:[%s4 + $0x8] sm:$0xff]
      %v884 = vld [vmem:[%s4 + $0x10] sm:$0xff]
      %v885 = vld [vmem:[%s4 + $0x18] sm:$0xff]
      %887 = vset.pattern.permute.xlu0 0
      %888 = vperm.xlu0 %887, %v882
      %v889 = vpop.permute.xlu0 %888
      %892 = vset.pattern.permute.xlu0 0
      %893 = vperm.xlu0 %892, %v883
      %v894 = vpop.permute.xlu0 %893
      %897 = vset.pattern.permute.xlu0 0
      %898 = vperm.xlu0 %897, %v884
      %v899 = vpop.permute.xlu0 %898
      %902 = vset.pattern.permute.xlu0 0
      %903 = vperm.xlu0 %902, %v885
      %v904 = vpop.permute.xlu0 %903
      %v906 = vadd.f32 %v860, %v889
      %v907 = vadd.f32 %v862, %v889
      %v908 = vadd.f32 %v866, %v894
      %v909 = vadd.f32 %v868, %v894
      %v910 = vadd.f32 %v872, %v899
      %v911 = vadd.f32 %v874, %v899
      %v912 = vadd.f32 %v878, %v904
      %v913 = vadd.f32 %v880, %v904
      %vm914 = vcmp.gt.f32.partialorder %v906, 0.0
      %vm915 = vcmp.gt.f32.partialorder %v907, 0.0
      %vm916 = vcmp.gt.f32.partialorder %v908, 0.0
      %vm917 = vcmp.gt.f32.partialorder %v909, 0.0
      %vm918 = vcmp.gt.f32.partialorder %v910, 0.0
      %vm919 = vcmp.gt.f32.partialorder %v911, 0.0
      %vm920 = vcmp.gt.f32.partialorder %v912, 0.0
      %vm921 = vcmp.gt.f32.partialorder %v913, 0.0
      %v922 = vmin.f32 %v906, 0.0
      %v923 = vmin.f32 %v907, 0.0
      %v924 = vmin.f32 %v908, 0.0
      %v925 = vmin.f32 %v909, 0.0
      %v926 = vmin.f32 %v910, 0.0
      %v927 = vmin.f32 %v911, 0.0
      %v928 = vmin.f32 %v912, 0.0
      %v929 = vmin.f32 %v913, 0.0
      %v930 = vmul.f32 %v922, 1.442695
      %v931 = vpow.pop %v930
      %v932 = vmul.f32 %v923, 1.442695
      %v933 = vpow.pop %v932
      %v934 = vmul.f32 %v924, 1.442695
      %v935 = vpow.pop %v934
      %v936 = vmul.f32 %v925, 1.442695
      %v937 = vpow.pop %v936
      %v938 = vmul.f32 %v926, 1.442695
      %v939 = vpow.pop %v938
      %v940 = vmul.f32 %v927, 1.442695
      %v941 = vpow.pop %v940
      %v942 = vmul.f32 %v928, 1.442695
      %v943 = vpow.pop %v942
      %v944 = vmul.f32 %v929, 1.442695
      %v945 = vpow.pop %v944
      %v946 = vsub.f32 %v931, 1.0
      %v947 = vsub.f32 %v933, 1.0
      %v948 = vsub.f32 %v935, 1.0
      %v949 = vsub.f32 %v937, 1.0
      %v950 = vsub.f32 %v939, 1.0
      %v951 = vsub.f32 %v941, 1.0
      %v952 = vsub.f32 %v943, 1.0
      %v953 = vsub.f32 %v945, 1.0
      %v954 = vsel %vm914, %v906, %v946
      %v955 = vsel %vm915, %v907, %v947
      %v956 = vsel %vm916, %v908, %v948
      %v957 = vsel %vm917, %v909, %v949
      %v958 = vsel %vm918, %v910, %v950
      %v959 = vsel %vm919, %v911, %v951
      %v960 = vsel %vm920, %v912, %v952
      %v961 = vsel %vm921, %v913, %v953
      %v962 = vld [vmem:[%s5] sm:$0x7]
      %v963 = vld [vmem:[%s6] sm:$0x7]
      %965 = vset.pattern.permute.xlu0 0
      %966 = vperm.xlu0 %965, %v963
      %v967 = vpop.permute.xlu0 %966
      %vm969 = vcmask 261120
      %v971 = vsel %vm969, %v962, 0
      %973 = vmatprep.subr.mxu0 %v955
      %974 = vmatpush1.msra.mxu0 %v954
      %975 = vmatprep.subr.mxu0 %v957
      %976 = vmatpush1.msra.mxu0 %v956
      %977 = vmatprep.subr.mxu0 %v959
      %978 = vmatpush1.msra.mxu0 %v958
      %979 = vmatprep.subr.mxu0 %v961
      %980 = vmatpush1.msra.mxu0 %v960
      %981 = vmatprep.subr.mxu0 0.0
      %982 = vmatpush1.msra.mxu0 0.0
      %983 = vmatprep.subr.mxu0 0.0
      %984 = vmatpush1.msra.mxu0 0.0
      %985 = vmatprep.subr.mxu0 0.0
      %986 = vmatpush1.msra.mxu0 0.0
      %987 = vmatprep.subr.mxu0 0.0
      %988 = vmatpush1.msra.mxu0 0.0
      %989 = vmatprep.subr.mxu0 0.0
      %990 = vmatpush1.msra.mxu0 0.0
      %991 = vmatprep.subr.mxu0 0.0
      %992 = vmatpush1.msra.mxu0 0.0
      %993 = vmatprep.subr.mxu0 0.0
      %994 = vmatpush1.msra.mxu0 0.0
      %995 = vmatprep.subr.mxu0 0.0
      %996 = vmatpush1.msra.mxu0 0.0
      %997 = vmatprep.subr.mxu0 0.0
      %998 = vmatpush1.msra.mxu0 0.0
      %999 = vmatprep.subr.mxu0 0.0
      %1000 = vmatpush1.msra.mxu0 0.0
      %1001 = vmatprep.subr.mxu0 0.0
      %1002 = vmatpush1.msra.mxu0 0.0
      %1003 = vmatprep.subr.mxu0 0.0
      %1004 = vmatpush1.msra.mxu0 0.0
      %1005 = vmatprep.subr.mxu0 0.0
      %1006 = vmatpush1.msra.mxu0 0.0
      %1007 = vmatprep.subr.mxu0 0.0
      %1008 = vmatpush1.msra.mxu0 0.0
      %1009 = vmatprep.subr.mxu0 0.0
      %1010 = vmatpush1.msra.mxu0 0.0
      %1011 = vmatprep.subr.mxu0 0.0
      %1012 = vmatpush1.msra.mxu0 0.0
      %1013 = vmatprep.subr.mxu0 0.0
      %1014 = vmatpush1.msra.mxu0 0.0
      %1015 = vmatprep.subr.mxu0 0.0
      %1016 = vmatpush1.msra.mxu0 0.0
      %1017 = vmatprep.subr.mxu0 0.0
      %1018 = vmatpush1.msra.mxu0 0.0
      %1019 = vmatprep.subr.mxu0 0.0
      %1020 = vmatpush1.msra.mxu0 0.0
      %1021 = vmatprep.subr.mxu0 0.0
      %1022 = vmatpush1.msra.mxu0 0.0
      %1023 = vmatprep.subr.mxu0 0.0
      %1024 = vmatpush1.msra.mxu0 0.0
      %1025 = vmatprep.subr.mxu0 0.0
      %1026 = vmatpush1.msra.mxu0 0.0
      %1027 = vmatprep.subr.mxu0 0.0
      %1028 = vmatpush1.msra.mxu0 0.0
      %1029 = vmatprep.subr.mxu0 0.0
      %1030 = vmatpush1.msra.mxu0 0.0
      %1031 = vmatprep.subr.mxu0 0.0
      %1032 = vmatpush1.msra.mxu0 0.0
      %1033 = vmatprep.subr.mxu0 0.0
      %1034 = vmatpush1.msra.mxu0 0.0
      %1035 = vmatprep.subr.mxu0 0.0
      %1036 = vmatpush1.msra.mxu0 0.0
      %1037 = vmatprep.mubr.f32.mxu0 0.0
      %1038 = vmatmul.mubr.f32.gmra.mrb[0].mxu0 %v971
      %v1039 = vpop.f32.mrb[0].mxu0
      %v1040 = vadd.f32 %v967, %v1039
      %v1041 = vpop.f32.mrb[0].mxu0
      %v1042 = vadd.f32 %v967, %v1041
      %1043 = vdwg.mxu0
      %v1044 = vtanh.pop %v1040
      %v1045 = vtanh.pop %v1042
      %v1046 = vmul.f32 %v1044, %v758
      %v1047 = vmul.f32 %v1045, %v762
      %v1049 = vlaneseq
      %v1050 = vshrl.u32 %v1049, 7
      %v1051 = vsub.s32 0, %v1050
      %v1052 = vrot.slane %v725, %v1051
      %v1053 = vlaneseq
      %v1054 = vshrl.u32 %v1053, 7
      %v1055 = vsub.s32 1, %v1054
      %v1056 = vrot.slane %v725, %v1055
      %v1057 = vcombine.low %v1052, %v1056
      %v1059 = vmul.f32 %v723, %v1057
      %v1061 = vcombine.high %v1059, %v1059
      %v1063 = vadd.f32 %v1046, %v1059
      %v1064 = vadd.f32 %v1047, %v1061
      %v1065 = vld [vmem:[%s7] sm:$0xff]
      %v1066 = vld [vmem:[%s7 + $0x8] sm:$0xff]
      %v1067 = vld [vmem:[%s7 + $0x10] sm:$0xff]
      %v1068 = vld [vmem:[%s7 + $0x18] sm:$0xff]
      %v1069 = vld [vmem:[%s8] sm:$0xff]
      %v1070 = vld [vmem:[%s8 + $0x8] sm:$0xff]
      %v1071 = vld [vmem:[%s8 + $0x10] sm:$0xff]
      %v1072 = vld [vmem:[%s8 + $0x18] sm:$0xff]
      %1074 = vset.pattern.permute.xlu0 0
      %1075 = vperm.xlu0 %1074, %v1069
      %v1076 = vpop.permute.xlu0 %1075
      %1079 = vset.pattern.permute.xlu0 0
      %1080 = vperm.xlu0 %1079, %v1070
      %v1081 = vpop.permute.xlu0 %1080
      %1084 = vset.pattern.permute.xlu0 0
      %1085 = vperm.xlu0 %1084, %v1071
      %v1086 = vpop.permute.xlu0 %1085
      %1089 = vset.pattern.permute.xlu0 0
      %1090 = vperm.xlu0 %1089, %v1072
      %v1091 = vpop.permute.xlu0 %1090
      %v1093 = vmul.f32 %v1076, %v758
      %v1094 = vmul.f32 %v1076, %v762
      %v1095 = vmul.f32 %v1081, %v758
      %v1096 = vmul.f32 %v1081, %v762
      %v1097 = vmul.f32 %v1086, %v758
      %v1098 = vmul.f32 %v1086, %v762
      %v1099 = vmul.f32 %v1091, %v758
      %v1100 = vmul.f32 %v1091, %v762
      %v1102 = vsel %vm775, %v1065, 0
      %v1105 = vsel %vm775, %v1066, 0
      %v1108 = vsel %vm775, %v1067, 0
      %v1111 = vsel %vm775, %v1068, 0
      %v1114 = vsel %vm788, %v1063, 0
      %v1117 = vsel %vm788, %v1064, 0
      %1119 = vmatprep.subr.mxu0 %v1117
      %1120 = vmatpush1.msra.mxu0 %v1114
      %1121 = vmatprep.subr.mxu0 0.0
      %1122 = vmatpush1.msra.mxu0 0.0
      %1123 = vmatprep.subr.mxu0 0.0
      %1124 = vmatpush1.msra.mxu0 0.0
      %1125 = vmatprep.subr.mxu0 0.0
      %1126 = vmatpush1.msra.mxu0 0.0
      %1127 = vmatprep.subr.mxu0 0.0
      %1128 = vmatpush1.msra.mxu0 0.0
      %1129 = vmatprep.subr.mxu0 0.0
      %1130 = vmatpush1.msra.mxu0 0.0
      %1131 = vmatprep.subr.mxu0 0.0
      %1132 = vmatpush1.msra.mxu0 0.0
      %1133 = vmatprep.subr.mxu0 0.0
      %1134 = vmatpush1.msra.mxu0 0.0
      %1135 = vmatprep.subr.mxu0 0.0
      %1136 = vmatpush1.msra.mxu0 0.0
      %1137 = vmatprep.subr.mxu0 0.0
      %1138 = vmatpush1.msra.mxu0 0.0
      %1139 = vmatprep.subr.mxu0 0.0
      %1140 = vmatpush1.msra.mxu0 0.0
      %1141 = vmatprep.subr.mxu0 0.0
      %1142 = vmatpush1.msra.mxu0 0.0
      %1143 = vmatprep.subr.mxu0 0.0
      %1144 = vmatpush1.msra.mxu0 0.0
      %1145 = vmatprep.subr.mxu0 0.0
      %1146 = vmatpush1.msra.mxu0 0.0
      %1147 = vmatprep.subr.mxu0 0.0
      %1148 = vmatpush1.msra.mxu0 0.0
      %1149 = vmatprep.subr.mxu0 0.0
      %1150 = vmatpush1.msra.mxu0 0.0
      %1151 = vmatprep.subr.mxu0 0.0
      %1152 = vmatpush1.msra.mxu0 0.0
      %1153 = vmatprep.subr.mxu0 0.0
      %1154 = vmatpush1.msra.mxu0 0.0
      %1155 = vmatprep.subr.mxu0 0.0
      %1156 = vmatpush1.msra.mxu0 0.0
      %1157 = vmatprep.subr.mxu0 0.0
      %1158 = vmatpush1.msra.mxu0 0.0
      %1159 = vmatprep.subr.mxu0 0.0
      %1160 = vmatpush1.msra.mxu0 0.0
      %1161 = vmatprep.subr.mxu0 0.0
      %1162 = vmatpush1.msra.mxu0 0.0
      %1163 = vmatprep.subr.mxu0 0.0
      %1164 = vmatpush1.msra.mxu0 0.0
      %1165 = vmatprep.subr.mxu0 0.0
      %1166 = vmatpush1.msra.mxu0 0.0
      %1167 = vmatprep.subr.mxu0 0.0
      %1168 = vmatpush1.msra.mxu0 0.0
      %1169 = vmatprep.subr.mxu0 0.0
      %1170 = vmatpush1.msra.mxu0 0.0
      %1171 = vmatprep.subr.mxu0 0.0
      %1172 = vmatpush1.msra.mxu0 0.0
      %1173 = vmatprep.subr.mxu0 0.0
      %1174 = vmatpush1.msra.mxu0 0.0
      %1175 = vmatprep.subr.mxu0 0.0
      %1176 = vmatpush1.msra.mxu0 0.0
      %1177 = vmatprep.subr.mxu0 0.0
      %1178 = vmatpush1.msra.mxu0 0.0
      %1179 = vmatprep.subr.mxu0 0.0
      %1180 = vmatpush1.msra.mxu0 0.0
      %1181 = vmatprep.subr.mxu0 0.0
      %1182 = vmatpush1.msra.mxu0 0.0
      %1183 = vmatprep.mubr.f32.mxu0 0.0
      %1184 = vmatmul.mubr.f32.gmra.mrb[0].mxu0 %v1102
      %v1185 = vpop.f32.mrb[0].mxu0
      %v1186 = vadd.f32 %v1093, %v1185
      %v1187 = vpop.f32.mrb[0].mxu0
      %v1188 = vadd.f32 %v1094, %v1187
      %1189 = vmatprep.mubr.f32.mxu0 0.0
      %1190 = vmatmul.mubr.f32.gmra.mrb[0].mxu0 %v1105
      %v1191 = vpop.f32.mrb[0].mxu0
      %v1192 = vadd.f32 %v1095, %v1191
      %v1193 = vpop.f32.mrb[0].mxu0
      %v1194 = vadd.f32 %v1096, %v1193
      %1195 = vmatprep.mubr.f32.mxu0 0.0
      %1196 = vmatmul.mubr.f32.gmra.mrb[0].mxu0 %v1108
      %v1197 = vpop.f32.mrb[0].mxu0
      %v1198 = vadd.f32 %v1097, %v1197
      %v1199 = vpop.f32.mrb[0].mxu0
      %v1200 = vadd.f32 %v1098, %v1199
      %1201 = vmatprep.mubr.f32.mxu0 0.0
      %1202 = vmatmul.mubr.f32.gmra.mrb[0].mxu0 %v1111
      %v1203 = vpop.f32.mrb[0].mxu0
      %v1204 = vadd.f32 %v1099, %v1203
      %v1205 = vpop.f32.mrb[0].mxu0
      %v1206 = vadd.f32 %v1100, %v1205
      %1207 = vdwg.mxu0
      %v1208 = vld [vmem:[%s9] sm:$0xff]
      %v1209 = vld [vmem:[%s9 + $0x8] sm:$0xff]
      %v1210 = vld [vmem:[%s9 + $0x10] sm:$0xff]
      %v1211 = vld [vmem:[%s9 + $0x18] sm:$0xff]
      %1213 = vset.pattern.permute.xlu0 0
      %1214 = vperm.xlu0 %1213, %v1208
      %v1215 = vpop.permute.xlu0 %1214
      %1218 = vset.pattern.permute.xlu0 0
      %1219 = vperm.xlu0 %1218, %v1209
      %v1220 = vpop.permute.xlu0 %1219
      %1223 = vset.pattern.permute.xlu0 0
      %1224 = vperm.xlu0 %1223, %v1210
      %v1225 = vpop.permute.xlu0 %1224
      %1228 = vset.pattern.permute.xlu0 0
      %1229 = vperm.xlu0 %1228, %v1211
      %v1230 = vpop.permute.xlu0 %1229
      %v1232 = vadd.f32 %v1186, %v1215
      %v1233 = vadd.f32 %v1188, %v1215
      %v1234 = vadd.f32 %v1192, %v1220
      %v1235 = vadd.f32 %v1194, %v1220
      %v1236 = vadd.f32 %v1198, %v1225
      %v1237 = vadd.f32 %v1200, %v1225
      %v1238 = vadd.f32 %v1204, %v1230
      %v1239 = vadd.f32 %v1206, %v1230
      %vm1240 = vcmp.gt.f32.partialorder %v1232, 0.0
      %vm1241 = vcmp.gt.f32.partialorder %v1233, 0.0
      %vm1242 = vcmp.gt.f32.partialorder %v1234, 0.0
      %vm1243 = vcmp.gt.f32.partialorder %v1235, 0.0
      %vm1244 = vcmp.gt.f32.partialorder %v1236, 0.0
      %vm1245 = vcmp.gt.f32.partialorder %v1237, 0.0
      %vm1246 = vcmp.gt.f32.partialorder %v1238, 0.0
      %vm1247 = vcmp.gt.f32.partialorder %v1239, 0.0
      %v1248 = vmin.f32 %v1232, 0.0
      %v1249 = vmin.f32 %v1233, 0.0
      %v1250 = vmin.f32 %v1234, 0.0
      %v1251 = vmin.f32 %v1235, 0.0
      %v1252 = vmin.f32 %v1236, 0.0
      %v1253 = vmin.f32 %v1237, 0.0
      %v1254 = vmin.f32 %v1238, 0.0
      %v1255 = vmin.f32 %v1239, 0.0
      %v1256 = vmul.f32 %v1248, 1.442695
      %v1257 = vpow.pop %v1256
      %v1258 = vmul.f32 %v1249, 1.442695
      %v1259 = vpow.pop %v1258
      %v1260 = vmul.f32 %v1250, 1.442695
      %v1261 = vpow.pop %v1260
      %v1262 = vmul.f32 %v1251, 1.442695
      %v1263 = vpow.pop %v1262
      %v1264 = vmul.f32 %v1252, 1.442695
      %v1265 = vpow.pop %v1264
      %v1266 = vmul.f32 %v1253, 1.442695
      %v1267 = vpow.pop %v1266
      %v1268 = vmul.f32 %v1254, 1.442695
      %v1269 = vpow.pop %v1268
      %v1270 = vmul.f32 %v1255, 1.442695
      %v1271 = vpow.pop %v1270
      %v1272 = vsub.f32 %v1257, 1.0
      %v1273 = vsub.f32 %v1259, 1.0
      %v1274 = vsub.f32 %v1261, 1.0
      %v1275 = vsub.f32 %v1263, 1.0
      %v1276 = vsub.f32 %v1265, 1.0
      %v1277 = vsub.f32 %v1267, 1.0
      %v1278 = vsub.f32 %v1269, 1.0
      %v1279 = vsub.f32 %v1271, 1.0
      %v1280 = vsel %vm1240, %v1232, %v1272
      %v1281 = vsel %vm1241, %v1233, %v1273
      %v1282 = vsel %vm1242, %v1234, %v1274
      %v1283 = vsel %vm1243, %v1235, %v1275
      %v1284 = vsel %vm1244, %v1236, %v1276
      %v1285 = vsel %vm1245, %v1237, %v1277
      %v1286 = vsel %vm1246, %v1238, %v1278
      %v1287 = vsel %vm1247, %v1239, %v1279
      %v1288 = vld [vmem:[%s10] sm:$0x7]
      %v1289 = vld [vmem:[%s11] sm:$0x7]
      %1291 = vset.pattern.permute.xlu0 0
      %1292 = vperm.xlu0 %1291, %v1289
      %v1293 = vpop.permute.xlu0 %1292
      %v1296 = vsel %vm969, %v1288, 0
      %1298 = vmatprep.subr.mxu0 %v1281
      %1299 = vmatpush1.msra.mxu0 %v1280
      %1300 = vmatprep.subr.mxu0 %v1283
      %1301 = vmatpush1.msra.mxu0 %v1282
      %1302 = vmatprep.subr.mxu0 %v1285
      %1303 = vmatpush1.msra.mxu0 %v1284
      %1304 = vmatprep.subr.mxu0 %v1287
      %1305 = vmatpush1.msra.mxu0 %v1286
      %1306 = vmatprep.subr.mxu0 0.0
      %1307 = vmatpush1.msra.mxu0 0.0
      %1308 = vmatprep.subr.mxu0 0.0
      %1309 = vmatpush1.msra.mxu0 0.0
      %1310 = vmatprep.subr.mxu0 0.0
      %1311 = vmatpush1.msra.mxu0 0.0
      %1312 = vmatprep.subr.mxu0 0.0
      %1313 = vmatpush1.msra.mxu0 0.0
      %1314 = vmatprep.subr.mxu0 0.0
      %1315 = vmatpush1.msra.mxu0 0.0
      %1316 = vmatprep.subr.mxu0 0.0
      %1317 = vmatpush1.msra.mxu0 0.0
      %1318 = vmatprep.subr.mxu0 0.0
      %1319 = vmatpush1.msra.mxu0 0.0
      %1320 = vmatprep.subr.mxu0 0.0
      %1321 = vmatpush1.msra.mxu0 0.0
      %1322 = vmatprep.subr.mxu0 0.0
      %1323 = vmatpush1.msra.mxu0 0.0
      %1324 = vmatprep.subr.mxu0 0.0
      %1325 = vmatpush1.msra.mxu0 0.0
      %1326 = vmatprep.subr.mxu0 0.0
      %1327 = vmatpush1.msra.mxu0 0.0
      %1328 = vmatprep.subr.mxu0 0.0
      %1329 = vmatpush1.msra.mxu0 0.0
      %1330 = vmatprep.subr.mxu0 0.0
      %1331 = vmatpush1.msra.mxu0 0.0
      %1332 = vmatprep.subr.mxu0 0.0
      %1333 = vmatpush1.msra.mxu0 0.0
      %1334 = vmatprep.subr.mxu0 0.0
      %1335 = vmatpush1.msra.mxu0 0.0
      %1336 = vmatprep.subr.mxu0 0.0
      %1337 = vmatpush1.msra.mxu0 0.0
      %1338 = vmatprep.subr.mxu0 0.0
      %1339 = vmatpush1.msra.mxu0 0.0
      %1340 = vmatprep.subr.mxu0 0.0
      %1341 = vmatpush1.msra.mxu0 0.0
      %1342 = vmatprep.subr.mxu0 0.0
      %1343 = vmatpush1.msra.mxu0 0.0
      %1344 = vmatprep.subr.mxu0 0.0
      %1345 = vmatpush1.msra.mxu0 0.0
      %1346 = vmatprep.subr.mxu0 0.0
      %1347 = vmatpush1.msra.mxu0 0.0
      %1348 = vmatprep.subr.mxu0 0.0
      %1349 = vmatpush1.msra.mxu0 0.0
      %1350 = vmatprep.subr.mxu0 0.0
      %1351 = vmatpush1.msra.mxu0 0.0
      %1352 = vmatprep.subr.mxu0 0.0
      %1353 = vmatpush1.msra.mxu0 0.0
      %1354 = vmatprep.subr.mxu0 0.0
      %1355 = vmatpush1.msra.mxu0 0.0
      %1356 = vmatprep.subr.mxu0 0.0
      %1357 = vmatpush1.msra.mxu0 0.0
      %1358 = vmatprep.subr.mxu0 0.0
      %1359 = vmatpush1.msra.mxu0 0.0
      %1360 = vmatprep.subr.mxu0 0.0
      %1361 = vmatpush1.msra.mxu0 0.0
      %1362 = vmatprep.mubr.f32.mxu0 0.0
      %1363 = vmatmul.mubr.f32.gmra.mrb[0].mxu0 %v1296
      %v1364 = vpop.f32.mrb[0].mxu0
      %v1365 = vadd.f32 %v1293, %v1364
      %v1366 = vpop.f32.mrb[0].mxu0
      %v1367 = vadd.f32 %v1293, %v1366
      %1368 = vdwg.mxu0
      %v1369 = vtanh.pop %v1365
      %v1370 = vtanh.pop %v1367
      %v1371 = vld [vmem:[%s12] sm:$0xff]
      %v1372 = vld [vmem:[%s12 + $0x8] sm:$0xff]
      %v1373 = vld [vmem:[%s12 + $0x10] sm:$0xff]
      %v1374 = vld [vmem:[%s12 + $0x18] sm:$0xff]
      %v1375 = vld [vmem:[%s13] sm:$0xff]
      %v1376 = vld [vmem:[%s13 + $0x8] sm:$0xff]
      %v1377 = vld [vmem:[%s13 + $0x10] sm:$0xff]
      %v1378 = vld [vmem:[%s13 + $0x18] sm:$0xff]
      %1380 = vset.pattern.permute.xlu0 0
      %1381 = vperm.xlu0 %1380, %v1375
      %v1382 = vpop.permute.xlu0 %1381
      %1385 = vset.pattern.permute.xlu0 0
      %1386 = vperm.xlu0 %1385, %v1376
      %v1387 = vpop.permute.xlu0 %1386
      %1390 = vset.pattern.permute.xlu0 0
      %1391 = vperm.xlu0 %1390, %v1377
      %v1392 = vpop.permute.xlu0 %1391
      %1395 = vset.pattern.permute.xlu0 0
      %1396 = vperm.xlu0 %1395, %v1378
      %v1397 = vpop.permute.xlu0 %1396
      %v1399 = vmul.f32 %v1382, %v758
      %v1400 = vmul.f32 %v1382, %v762
      %v1401 = vmul.f32 %v1387, %v758
      %v1402 = vmul.f32 %v1387, %v762
      %v1403 = vmul.f32 %v1392, %v758
      %v1404 = vmul.f32 %v1392, %v762
      %v1405 = vmul.f32 %v1397, %v758
      %v1406 = vmul.f32 %v1397, %v762
      %v1408 = vsel %vm775, %v1371, 0
      %v1411 = vsel %vm775, %v1372, 0
      %v1414 = vsel %vm775, %v1373, 0
      %v1417 = vsel %vm775, %v1374, 0
      %1419 = vmatprep.subr.mxu0 %v1117
      %1420 = vmatpush1.msra.mxu0 %v1114
      %1421 = vmatprep.subr.mxu0 0.0
      %1422 = vmatpush1.msra.mxu0 0.0
      %1423 = vmatprep.subr.mxu0 0.0
      %1424 = vmatpush1.msra.mxu0 0.0
      %1425 = vmatprep.subr.mxu0 0.0
      %1426 = vmatpush1.msra.mxu0 0.0
      %1427 = vmatprep.subr.mxu0 0.0
      %1428 = vmatpush1.msra.mxu0 0.0
      %1429 = vmatprep.subr.mxu0 0.0
      %1430 = vmatpush1.msra.mxu0 0.0
      %1431 = vmatprep.subr.mxu0 0.0
      %1432 = vmatpush1.msra.mxu0 0.0
      %1433 = vmatprep.subr.mxu0 0.0
      %1434 = vmatpush1.msra.mxu0 0.0
      %1435 = vmatprep.subr.mxu0 0.0
      %1436 = vmatpush1.msra.mxu0 0.0
      %1437 = vmatprep.subr.mxu0 0.0
      %1438 = vmatpush1.msra.mxu0 0.0
      %1439 = vmatprep.subr.mxu0 0.0
      %1440 = vmatpush1.msra.mxu0 0.0
      %1441 = vmatprep.subr.mxu0 0.0
      %1442 = vmatpush1.msra.mxu0 0.0
      %1443 = vmatprep.subr.mxu0 0.0
      %1444 = vmatpush1.msra.mxu0 0.0
      %1445 = vmatprep.subr.mxu0 0.0
      %1446 = vmatpush1.msra.mxu0 0.0
      %1447 = vmatprep.subr.mxu0 0.0
      %1448 = vmatpush1.msra.mxu0 0.0
      %1449 = vmatprep.subr.mxu0 0.0
      %1450 = vmatpush1.msra.mxu0 0.0
      %1451 = vmatprep.subr.mxu0 0.0
      %1452 = vmatpush1.msra.mxu0 0.0
      %1453 = vmatprep.subr.mxu0 0.0
      %1454 = vmatpush1.msra.mxu0 0.0
      %1455 = vmatprep.subr.mxu0 0.0
      %1456 = vmatpush1.msra.mxu0 0.0
      %1457 = vmatprep.subr.mxu0 0.0
      %1458 = vmatpush1.msra.mxu0 0.0
      %1459 = vmatprep.subr.mxu0 0.0
      %1460 = vmatpush1.msra.mxu0 0.0
      %1461 = vmatprep.subr.mxu0 0.0
      %1462 = vmatpush1.msra.mxu0 0.0
      %1463 = vmatprep.subr.mxu0 0.0
      %1464 = vmatpush1.msra.mxu0 0.0
      %1465 = vmatprep.subr.mxu0 0.0
      %1466 = vmatpush1.msra.mxu0 0.0
      %1467 = vmatprep.subr.mxu0 0.0
      %1468 = vmatpush1.msra.mxu0 0.0
      %1469 = vmatprep.subr.mxu0 0.0
      %1470 = vmatpush1.msra.mxu0 0.0
      %1471 = vmatprep.subr.mxu0 0.0
      %1472 = vmatpush1.msra.mxu0 0.0
      %1473 = vmatprep.subr.mxu0 0.0
      %1474 = vmatpush1.msra.mxu0 0.0
      %1475 = vmatprep.subr.mxu0 0.0
      %1476 = vmatpush1.msra.mxu0 0.0
      %1477 = vmatprep.subr.mxu0 0.0
      %1478 = vmatpush1.msra.mxu0 0.0
      %1479 = vmatprep.subr.mxu0 0.0
      %1480 = vmatpush1.msra.mxu0 0.0
      %1481 = vmatprep.subr.mxu0 0.0
      %1482 = vmatpush1.msra.mxu0 0.0
      %1483 = vmatprep.mubr.f32.mxu0 0.0
      %1484 = vmatmul.mubr.f32.gmra.mrb[0].mxu0 %v1408
      %v1485 = vpop.f32.mrb[0].mxu0
      %v1486 = vadd.f32 %v1399, %v1485
      %v1487 = vpop.f32.mrb[0].mxu0
      %v1488 = vadd.f32 %v1400, %v1487
      %1489 = vmatprep.mubr.f32.mxu0 0.0
      %1490 = vmatmul.mubr.f32.gmra.mrb[0].mxu0 %v1411
      %v1491 = vpop.f32.mrb[0].mxu0
      %v1492 = vadd.f32 %v1401, %v1491
      %v1493 = vpop.f32.mrb[0].mxu0
      %v1494 = vadd.f32 %v1402, %v1493
      %1495 = vmatprep.mubr.f32.mxu0 0.0
      %1496 = vmatmul.mubr.f32.gmra.mrb[0].mxu0 %v1414
      %v1497 = vpop.f32.mrb[0].mxu0
      %v1498 = vadd.f32 %v1403, %v1497
      %v1499 = vpop.f32.mrb[0].mxu0
      %v1500 = vadd.f32 %v1404, %v1499
      %1501 = vmatprep.mubr.f32.mxu0 0.0
      %1502 = vmatmul.mubr.f32.gmra.mrb[0].mxu0 %v1417
      %v1503 = vpop.f32.mrb[0].mxu0
      %v1504 = vadd.f32 %v1405, %v1503
      %v1505 = vpop.f32.mrb[0].mxu0
      %v1506 = vadd.f32 %v1406, %v1505
      %1507 = vdwg.mxu0
      %v1508 = vld [vmem:[%s14] sm:$0xff]
      %v1509 = vld [vmem:[%s14 + $0x8] sm:$0xff]
      %v1510 = vld [vmem:[%s14 + $0x10] sm:$0xff]
      %v1511 = vld [vmem:[%s14 + $0x18] sm:$0xff]
      %1513 = vset.pattern.permute.xlu0 0
      %1514 = vperm.xlu0 %1513, %v1508
      %v1515 = vpop.permute.xlu0 %1514
      %1518 = vset.pattern.permute.xlu0 0
      %1519 = vperm.xlu0 %1518, %v1509
      %v1520 = vpop.permute.xlu0 %1519
      %1523 = vset.pattern.permute.xlu0 0
      %1524 = vperm.xlu0 %1523, %v1510
      %v1525 = vpop.permute.xlu0 %1524
      %1528 = vset.pattern.permute.xlu0 0
      %1529 = vperm.xlu0 %1528, %v1511
      %v1530 = vpop.permute.xlu0 %1529
      %v1532 = vadd.f32 %v1486, %v1515
      %v1533 = vadd.f32 %v1488, %v1515
      %v1534 = vadd.f32 %v1492, %v1520
      %v1535 = vadd.f32 %v1494, %v1520
      %v1536 = vadd.f32 %v1498, %v1525
      %v1537 = vadd.f32 %v1500, %v1525
      %v1538 = vadd.f32 %v1504, %v1530
      %v1539 = vadd.f32 %v1506, %v1530
      %vm1540 = vcmp.gt.f32.partialorder %v1532, 0.0
      %vm1541 = vcmp.gt.f32.partialorder %v1533, 0.0
      %vm1542 = vcmp.gt.f32.partialorder %v1534, 0.0
      %vm1543 = vcmp.gt.f32.partialorder %v1535, 0.0
      %vm1544 = vcmp.gt.f32.partialorder %v1536, 0.0
      %vm1545 = vcmp.gt.f32.partialorder %v1537, 0.0
      %vm1546 = vcmp.gt.f32.partialorder %v1538, 0.0
      %vm1547 = vcmp.gt.f32.partialorder %v1539, 0.0
      %v1548 = vmin.f32 %v1532, 0.0
      %v1549 = vmin.f32 %v1533, 0.0
      %v1550 = vmin.f32 %v1534, 0.0
      %v1551 = vmin.f32 %v1535, 0.0
      %v1552 = vmin.f32 %v1536, 0.0
      %v1553 = vmin.f32 %v1537, 0.0
      %v1554 = vmin.f32 %v1538, 0.0
      %v1555 = vmin.f32 %v1539, 0.0
      %v1556 = vmul.f32 %v1548, 1.442695
      %v1557 = vpow.pop %v1556
      %v1558 = vmul.f32 %v1549, 1.442695
      %v1559 = vpow.pop %v1558
      %v1560 = vmul.f32 %v1550, 1.442695
      %v1561 = vpow.pop %v1560
      %v1562 = vmul.f32 %v1551, 1.442695
      %v1563 = vpow.pop %v1562
      %v1564 = vmul.f32 %v1552, 1.442695
      %v1565 = vpow.pop %v1564
      %v1566 = vmul.f32 %v1553, 1.442695
      %v1567 = vpow.pop %v1566
      %v1568 = vmul.f32 %v1554, 1.442695
      %v1569 = vpow.pop %v1568
      %v1570 = vmul.f32 %v1555, 1.442695
      %v1571 = vpow.pop %v1570
      %v1572 = vsub.f32 %v1557, 1.0
      %v1573 = vsub.f32 %v1559, 1.0
      %v1574 = vsub.f32 %v1561, 1.0
      %v1575 = vsub.f32 %v1563, 1.0
      %v1576 = vsub.f32 %v1565, 1.0
      %v1577 = vsub.f32 %v1567, 1.0
      %v1578 = vsub.f32 %v1569, 1.0
      %v1579 = vsub.f32 %v1571, 1.0
      %v1580 = vsel %vm1540, %v1532, %v1572
      %v1581 = vsel %vm1541, %v1533, %v1573
      %v1582 = vsel %vm1542, %v1534, %v1574
      %v1583 = vsel %vm1543, %v1535, %v1575
      %v1584 = vsel %vm1544, %v1536, %v1576
      %v1585 = vsel %vm1545, %v1537, %v1577
      %v1586 = vsel %vm1546, %v1538, %v1578
      %v1587 = vsel %vm1547, %v1539, %v1579
      %v1588 = vld [vmem:[%s15] sm:$0x7]
      %v1589 = vld [vmem:[%s16] sm:$0x7]
      %1591 = vset.pattern.permute.xlu0 0
      %1592 = vperm.xlu0 %1591, %v1589
      %v1593 = vpop.permute.xlu0 %1592
      %v1596 = vsel %vm969, %v1588, 0
      %1598 = vmatprep.subr.mxu0 %v1581
      %1599 = vmatpush1.msra.mxu0 %v1580
      %1600 = vmatprep.subr.mxu0 %v1583
      %1601 = vmatpush1.msra.mxu0 %v1582
      %1602 = vmatprep.subr.mxu0 %v1585
      %1603 = vmatpush1.msra.mxu0 %v1584
      %1604 = vmatprep.subr.mxu0 %v1587
      %1605 = vmatpush1.msra.mxu0 %v1586
      %1606 = vmatprep.subr.mxu0 0.0
      %1607 = vmatpush1.msra.mxu0 0.0
      %1608 = vmatprep.subr.mxu0 0.0
      %1609 = vmatpush1.msra.mxu0 0.0
      %1610 = vmatprep.subr.mxu0 0.0
      %1611 = vmatpush1.msra.mxu0 0.0
      %1612 = vmatprep.subr.mxu0 0.0
      %1613 = vmatpush1.msra.mxu0 0.0
      %1614 = vmatprep.subr.mxu0 0.0
      %1615 = vmatpush1.msra.mxu0 0.0
      %1616 = vmatprep.subr.mxu0 0.0
      %1617 = vmatpush1.msra.mxu0 0.0
      %1618 = vmatprep.subr.mxu0 0.0
      %1619 = vmatpush1.msra.mxu0 0.0
      %1620 = vmatprep.subr.mxu0 0.0
      %1621 = vmatpush1.msra.mxu0 0.0
      %1622 = vmatprep.subr.mxu0 0.0
      %1623 = vmatpush1.msra.mxu0 0.0
      %1624 = vmatprep.subr.mxu0 0.0
      %1625 = vmatpush1.msra.mxu0 0.0
      %1626 = vmatprep.subr.mxu0 0.0
      %1627 = vmatpush1.msra.mxu0 0.0
      %1628 = vmatprep.subr.mxu0 0.0
      %1629 = vmatpush1.msra.mxu0 0.0
      %1630 = vmatprep.subr.mxu0 0.0
      %1631 = vmatpush1.msra.mxu0 0.0
      %1632 = vmatprep.subr.mxu0 0.0
      %1633 = vmatpush1.msra.mxu0 0.0
      %1634 = vmatprep.subr.mxu0 0.0
      %1635 = vmatpush1.msra.mxu0 0.0
      %1636 = vmatprep.subr.mxu0 0.0
      %1637 = vmatpush1.msra.mxu0 0.0
      %1638 = vmatprep.subr.mxu0 0.0
      %1639 = vmatpush1.msra.mxu0 0.0
      %1640 = vmatprep.subr.mxu0 0.0
      %1641 = vmatpush1.msra.mxu0 0.0
      %1642 = vmatprep.subr.mxu0 0.0
      %1643 = vmatpush1.msra.mxu0 0.0
      %1644 = vmatprep.subr.mxu0 0.0
      %1645 = vmatpush1.msra.mxu0 0.0
      %1646 = vmatprep.subr.mxu0 0.0
      %1647 = vmatpush1.msra.mxu0 0.0
      %1648 = vmatprep.subr.mxu0 0.0
      %1649 = vmatpush1.msra.mxu0 0.0
      %1650 = vmatprep.subr.mxu0 0.0
      %1651 = vmatpush1.msra.mxu0 0.0
      %1652 = vmatprep.subr.mxu0 0.0
      %1653 = vmatpush1.msra.mxu0 0.0
      %1654 = vmatprep.subr.mxu0 0.0
      %1655 = vmatpush1.msra.mxu0 0.0
      %1656 = vmatprep.subr.mxu0 0.0
      %1657 = vmatpush1.msra.mxu0 0.0
      %1658 = vmatprep.subr.mxu0 0.0
      %1659 = vmatpush1.msra.mxu0 0.0
      %1660 = vmatprep.subr.mxu0 0.0
      %1661 = vmatpush1.msra.mxu0 0.0
      %1662 = vmatprep.mubr.f32.mxu0 0.0
      %1663 = vmatmul.mubr.f32.gmra.mrb[0].mxu0 %v1596
      %v1664 = vpop.f32.mrb[0].mxu0
      %v1665 = vadd.f32 %v1593, %v1664
      %v1666 = vpop.f32.mrb[0].mxu0
      %v1667 = vadd.f32 %v1593, %v1666
      %1668 = vdwg.mxu0
      %v1669 = vsub.f32 0.0, %v1665
      %v1670 = vsub.f32 0.0, %v1667
      %v1671 = vmul.f32 %v1669, 1.442695
      %v1672 = vpow.pop %v1671
      %v1673 = vmul.f32 %v1670, 1.442695
      %v1674 = vpow.pop %v1673
      %v1675 = vadd.f32 %v1672, 1.0
      %v1676 = vadd.f32 %v1674, 1.0
      %v1677 = vrcp.pop %v1675
      %v1678 = vmul.f32 1.0, %v1677
      %v1679 = vrcp.pop %v1676
      %v1680 = vmul.f32 1.0, %v1679
      %v1681 = vmul.f32 %v1369, %v758
      %v1682 = vmul.f32 %v1370, %v762
      %v1683 = vadd.f32 %v1681, %v1059
      %v1684 = vadd.f32 %v1682, %v1061
      %v1687 = vcombine.low %v1044, %v1045
      %1689 = vst [vmem:[%s702] sm:$0x77] %v1687
      %v1692 = vcombine.low %v1369, %v1370
      %1694 = vst [vmem:[%s707] sm:$0x77] %v1692
      %v1695 = vcombine.low %v1063, %v1064
      %1697 = vst [vmem:[%s712] sm:$0x77] %v1695
      %v1700 = vcombine.low %v1683, %v1684
      %1702 = vst [vmem:[%s717] sm:$0x77] %v1700
      %v1705 = vcombine.low %v1678, %v1680
      %1707 = vst [vmem:[%s722] sm:$0x77] %v1705
      %p1708 = scmp.lt.s32.totalorder %s33, 1
      %s1709 = scalar_select %p1708, %s33, 1
      %s1710 = smul.addr %s1709, 2
      %s1711 = smul.addr %s1710, 4
      %s1712 = scalar_lea.vmem %s17, %s1711
      %p1713 = scmp.lt.s32.totalorder %s33, 1
      %s1714 = scalar_select %p1713, %s33, 1
      %s1715 = smul.addr %s1714, 2
      %s1716 = smul.addr %s1715, 4
      %s1717 = scalar_lea.vmem %s18, %s1716
      %p1718 = scmp.lt.s32.totalorder %s33, 1
      %s1719 = scalar_select %p1718, %s33, 1
      %s1720 = smul.addr %s1719, 2
      %s1721 = smul.addr %s1720, 4
      %s1722 = scalar_lea.vmem %s19, %s1721
      %p1723 = scmp.lt.s32.totalorder %s33, 1
      %s1724 = scalar_select %p1723, %s33, 1
      %s1725 = smul.addr %s1724, 2
      %s1726 = smul.addr %s1725, 4
      %s1727 = scalar_lea.vmem %s20, %s1726
      %p1728 = scmp.lt.s32.totalorder %s33, 1
      %s1729 = scalar_select %p1728, %s33, 1
      %s1730 = smul.addr %s1729, 2
      %s1731 = smul.addr %s1730, 4
      %s1732 = scalar_lea.vmem %s21, %s1731
      // Predicated region
      $region89: #{tpu_custom_call.1} parent=87 // pred_check
        %p1733 = pneg %p418
      $region90: #{tpu_custom_call.1} parent=87 // pred_check_branch
        %1735 = sbr.rel (%p1733) target = $region92
      $region91: #{tpu_custom_call.1} parent=87 // pred_region
        _
      $region92: #{tpu_custom_call.1} parent=87 // pred_fallthru
        _
      // Predicated region
      $region93: #{tpu_custom_call.1} parent=87 // pred_check
        %p1736 = pneg %p444
      $region94: #{tpu_custom_call.1} parent=87 // pred_check_branch
        %1738 = sbr.rel (%p1736) target = $region96
      $region95: #{tpu_custom_call.1} parent=87 // pred_region
        _
      $region96: #{tpu_custom_call.1} parent=87 // pred_fallthru
        _
      // Predicated region
      $region97: #{tpu_custom_call.1} parent=87 // pred_check
        %p1739 = pneg %p470
      $region98: #{tpu_custom_call.1} parent=87 // pred_check_branch
        %1741 = sbr.rel (%p1739) target = $region100
      $region99: #{tpu_custom_call.1} parent=87 // pred_region
        _
      $region100: #{tpu_custom_call.1} parent=87 // pred_fallthru
        _
      // Predicated region
      $region101: #{tpu_custom_call.1} parent=87 // pred_check
        %p1742 = pneg %p496
      $region102: #{tpu_custom_call.1} parent=87 // pred_check_branch
        %1744 = sbr.rel (%p1742) target = $region104
      $region103: #{tpu_custom_call.1} parent=87 // pred_region
        _
      $region104: #{tpu_custom_call.1} parent=87 // pred_fallthru
        _
      // Predicated region
      $region105: #{tpu_custom_call.1} parent=87 // pred_check
        %p1745 = pneg %p522
      $region106: #{tpu_custom_call.1} parent=87 // pred_check_branch
        %1747 = sbr.rel (%p1745) target = $region108
      $region107: #{tpu_custom_call.1} parent=87 // pred_region
        _
      $region108: #{tpu_custom_call.1} parent=87 // pred_fallthru
        _
    $region88: #{tpu_custom_call.1} parent=5 // pred_fallthru
      _
    %p1748 = scmp.le.s32.totalorder 2, %s28
    // Predicated region
    $region109: #{tpu_custom_call.1} parent=5 // pred_check
      %p1749 = pneg %p1748
    $region110: #{tpu_custom_call.1} parent=5 // pred_check_branch
      %1751 = sbr.rel (%p1749) target = $region112
    $region111: #{tpu_custom_call.1} parent=5 // pred_region
      %s1752 = ssub.s32 %s28, 2
      // Predicated region
      $region113: #{tpu_custom_call.1} parent=111 // pred_check
        %p1753 = pneg %p424
      $region114: #{tpu_custom_call.1} parent=111 // pred_check_branch
        %1755 = sbr.rel (%p1753) target = $region116
      $region115: #{tpu_custom_call.1} parent=111 // pred_region
        %p1756 = scmp.lt.s32.totalorder %s34, 1
        %s1757 = scalar_select %p1756, %s34, 1
        %s1758 = smul.addr %s1757, 2
        %s1759 = smul.addr %s1758, 4
        %s1760 = scalar_lea.vmem %s17, %s1759
      $region116: #{tpu_custom_call.1} parent=111 // pred_fallthru
        _
      // Predicated region
      $region117: #{tpu_custom_call.1} parent=111 // pred_check
        %p1761 = pneg %p450
      $region118: #{tpu_custom_call.1} parent=111 // pred_check_branch
        %1763 = sbr.rel (%p1761) target = $region120
      $region119: #{tpu_custom_call.1} parent=111 // pred_region
        %p1764 = scmp.lt.s32.totalorder %s34, 1
        %s1765 = scalar_select %p1764, %s34, 1
        %s1766 = smul.addr %s1765, 2
        %s1767 = smul.addr %s1766, 4
        %s1768 = scalar_lea.vmem %s18, %s1767
      $region120: #{tpu_custom_call.1} parent=111 // pred_fallthru
        _
      // Predicated region
      $region121: #{tpu_custom_call.1} parent=111 // pred_check
        %p1769 = pneg %p476
      $region122: #{tpu_custom_call.1} parent=111 // pred_check_branch
        %1771 = sbr.rel (%p1769) target = $region124
      $region123: #{tpu_custom_call.1} parent=111 // pred_region
        %p1772 = scmp.lt.s32.totalorder %s34, 1
        %s1773 = scalar_select %p1772, %s34, 1
        %s1774 = smul.addr %s1773, 2
        %s1775 = smul.addr %s1774, 4
        %s1776 = scalar_lea.vmem %s19, %s1775
      $region124: #{tpu_custom_call.1} parent=111 // pred_fallthru
        _
      // Predicated region
      $region125: #{tpu_custom_call.1} parent=111 // pred_check
        %p1777 = pneg %p502
      $region126: #{tpu_custom_call.1} parent=111 // pred_check_branch
        %1779 = sbr.rel (%p1777) target = $region128
      $region127: #{tpu_custom_call.1} parent=111 // pred_region
        %p1780 = scmp.lt.s32.totalorder %s34, 1
        %s1781 = scalar_select %p1780, %s34, 1
        %s1782 = smul.addr %s1781, 2
        %s1783 = smul.addr %s1782, 4
        %s1784 = scalar_lea.vmem %s20, %s1783
      $region128: #{tpu_custom_call.1} parent=111 // pred_fallthru
        _
      // Predicated region
      $region129: #{tpu_custom_call.1} parent=111 // pred_check
        %p1785 = pneg %p528
      $region130: #{tpu_custom_call.1} parent=111 // pred_check_branch
        %1787 = sbr.rel (%p1785) target = $region132
      $region131: #{tpu_custom_call.1} parent=111 // pred_region
        %p1788 = scmp.lt.s32.totalorder %s34, 1
        %s1789 = scalar_select %p1788, %s34, 1
        %s1790 = smul.addr %s1789, 2
        %s1791 = smul.addr %s1790, 4
        %s1792 = scalar_lea.vmem %s21, %s1791
      $region132: #{tpu_custom_call.1} parent=111 // pred_fallthru
        _
    $region112: #{tpu_custom_call.1} parent=5 // pred_fallthru
      _
  $region6: #{tpu_custom_call.1} parent=0 // loop_footer
    %s32 = sadd.s32 1, %s28
  $region7: #{tpu_custom_call.1} parent=0 // loop_footer_branch
    %27 = sbr.rel target = $region3
  $region8: #{tpu_custom_call.1} parent=0 // loop_exit
    _

</llo_original>
